<compile_context>
chip_gen: v6e
topology: v6e:2x2x1
jax: 0.10.0
libtpu: 0.0.40
codegen_flags: <defaults>
</compile_context>

<pallas_src>
import functools

import jax
import jax.numpy as jnp
from jax import lax
from jax.experimental import pallas as pl
from jax.experimental.pallas import tpu as pltpu


def _round_up(x, m):
    return ((x + m - 1) // m) * m


def _mlp_head_kernel(n_layers, units, units_pad, size, size_pad, unimix_ratio,
                     xa_ref, xb_ref, xc_ref, *refs):
    """refs = [W0a, W0b, W0c, g0, b0] + [W_i, g_i, b_i]*(n_layers-1)
              + [W_dist, b_dist, out_ref]."""
    out_ref = refs[-1]
    w = refs[:-1]
    wd_ref, bd_ref = w[-2], w[-1]
    cdt = xa_ref.dtype  # matmul operand dtype (f32, or bf16 on v6e/v7x)

    if units_pad > units:
        unit_mask = lax.broadcasted_iota(jnp.int32, (1, units_pad), 1) < units
    else:
        unit_mask = None

    def ln_elu(h, g, b):
        # nn.LayerNorm(units, eps=1e-3): biased variance, eps inside rsqrt.
        # Padded lanes of h are exactly 0 (zero-padded weight columns), so the
        # lane sum already equals the sum over the real `units`; only the
        # centered values need masking so padding doesn't pollute the variance.
        mu = jnp.sum(h, axis=-1, keepdims=True) * (1.0 / units)
        c = h - mu
        if unit_mask is not None:
            c = jnp.where(unit_mask, c, 0.0)
        var = jnp.sum(c * c, axis=-1, keepdims=True) * (1.0 / units)
        hn = c * lax.rsqrt(var + 1e-3) * g + b
        # ELU(alpha=1).  Padded lanes: g=b=0 -> hn=0 -> ELU(0)=0 stays padded.
        return jnp.where(hn > 0, hn, jnp.exp(hn) - 1.0)

    # first layer: concat fused into three MXU passes with f32 accumulate
    h = (jnp.dot(xa_ref[...], w[0][...], preferred_element_type=jnp.float32)
         + jnp.dot(xb_ref[...], w[1][...], preferred_element_type=jnp.float32)
         + jnp.dot(xc_ref[...], w[2][...], preferred_element_type=jnp.float32))
    h = ln_elu(h, w[3][...], w[4][...])

    off = 5
    for _ in range(1, n_layers):
        h = jnp.dot(h.astype(cdt), w[off][...],
                    preferred_element_type=jnp.float32)
        h = ln_elu(h, w[off + 1][...], w[off + 2][...])
        off += 3

    logits = jnp.dot(h.astype(cdt), wd_ref[...],
                     preferred_element_type=jnp.float32) + bd_ref[...]
    if size_pad > size:
        size_mask = lax.broadcasted_iota(jnp.int32, (1, size_pad), 1) < size
        logits = jnp.where(size_mask, logits, -1e30)

    # tools.OneHotDist unimix: probs = (1-r)*softmax(logits) + r/size ; log(.)
    m = jnp.max(logits, axis=-1, keepdims=True)
    e = jnp.exp(logits - m)
    inv = pl.reciprocal(jnp.sum(e, axis=-1, keepdims=True), approx=True)
    probs = e * inv * (1.0 - unimix_ratio) + unimix_ratio / size
    out_ref[...] = jnp.log(probs)


def bc_action_head_forward(features, idx, params, *, K, unimix_ratio=0.01,
                           tm=128, matmul_dtype=jnp.float32):
    """features: (B, T, D) float32; idx: (B, T-K) int32 in [0, K)."""
    B, T, D = features.shape
    L = T - K
    assert L > 0

    # --- glue (plain JAX): gather of x_{t+k} and time-embedding lookup.
    # (Data-dependent row gather; no clean single-BlockSpec equivalent, and it
    #  is a tiny fraction of the work.)  NOTE: no concat here any more.
    x_t = features[:, :L, :]                                        # (B, L, D)
    indices = jnp.arange(L, dtype=jnp.int32)[None, :] + idx         # (B, L) < T
    x_tk = jnp.take_along_axis(features, indices[..., None], axis=1)
    emb = params["emb"][idx]                                        # (B, L, D)

    N = B * L
    N_pad = _round_up(N, tm)

    def prep_rows(a):
        a = a.reshape(N, D).astype(matmul_dtype)
        if N_pad != N:
            a = jnp.pad(a, ((0, N_pad - N), (0, 0)))
        return a

    xa, xb, xc = prep_rows(x_t), prep_rows(x_tk), prep_rows(emb)

    layer_params = params["layers"]          # list of (W, gamma, beta)
    n_layers = len(layer_params)
    units = layer_params[0][0].shape[-1]
    U = _round_up(units, 128)                # lane-pad hidden width
    wd, bd = params["dist_w"], params["dist_b"]
    size = wd.shape[-1]
    S = _round_up(size, 128)                 # lane-dense output width

    def pad_mat(m_, rows, cols, dtype):
        m_ = m_.astype(dtype)
        return jnp.pad(m_, ((0, rows - m_.shape[0]), (0, cols - m_.shape[1])))

    def pad_row(v, cols):
        v = v.reshape(1, -1).astype(jnp.float32)
        return jnp.pad(v, ((0, 0), (0, cols - v.shape[1])))

    flat = []
    in_specs = [pl.BlockSpec((tm, D), lambda i: (i, 0))] * 3

    # first layer: split W0 (3D, units) into three (D, U) chunks
    w0, g0, b0 = layer_params[0]
    for j in range(3):
        flat.append(pad_mat(w0[j * D:(j + 1) * D, :], D, U, matmul_dtype))
        in_specs.append(pl.BlockSpec((D, U), lambda i: (0, 0)))
    flat += [pad_row(g0, U), pad_row(b0, U)]
    in_specs += [pl.BlockSpec((1, U), lambda i: (0, 0))] * 2

    for (w_, g_, b_) in layer_params[1:]:
        flat += [pad_mat(w_, U, U, matmul_dtype), pad_row(g_, U), pad_row(b_, U)]
        in_specs += [pl.BlockSpec((U, U), lambda i: (0, 0)),
                     pl.BlockSpec((1, U), lambda i: (0, 0)),
                     pl.BlockSpec((1, U), lambda i: (0, 0))]

    flat += [pad_mat(wd, U, S, matmul_dtype), pad_row(bd, S)]
    in_specs += [pl.BlockSpec((U, S), lambda i: (0, 0)),
                 pl.BlockSpec((1, S), lambda i: (0, 0))]

    kernel = functools.partial(_mlp_head_kernel, n_layers, units, U, size, S,
                               unimix_ratio)

    out = pl.pallas_call(
        kernel,
        out_shape=jax.ShapeDtypeStruct((N_pad, S), jnp.float32),
        grid=(N_pad // tm,),
        in_specs=in_specs,
        out_specs=pl.BlockSpec((tm, S), lambda i: (i, 0)),
        compiler_params=pltpu.CompilerParams(
            dimension_semantics=("parallel",),
            vmem_limit_bytes=32 * 1024 * 1024,   # fits v7x's 64 MiB physical
        ),
    )(xa, xb, xc, *flat)

    return out[:N, :size].reshape(B, L, size)


def _reference_forward(features, idx, params, *, K, unimix_ratio=0.01):
    B, T, D = features.shape
    L = T - K
    x_t = features[:, :L, :]
    indices = jnp.arange(L, dtype=jnp.int32)[None, :] + idx
    x_tplusk = jnp.take_along_axis(features, indices[..., None], axis=1)
    time_embed = params["emb"][idx]
    h = jnp.concatenate([x_t, x_tplusk, time_embed], axis=-1)
    for (w, g, b) in params["layers"]:
        h = h @ w
        mu = jnp.mean(h, axis=-1, keepdims=True)
        var = jnp.mean((h - mu) ** 2, axis=-1, keepdims=True)
        h = (h - mu) * jax.lax.rsqrt(var + 1e-3) * g + b
        h = jnp.where(h > 0, h, jnp.exp(h) - 1.0)
    logits = h @ params["dist_w"] + params["dist_b"]
    probs = jax.nn.softmax(logits, axis=-1)
    probs = probs * (1.0 - unimix_ratio) + unimix_ratio / logits.shape[-1]
    return jnp.log(probs)


def init_params(key, *, inp_dim, units, n_layers, size, K):
    """Deterministic synthetic init matching the PyTorch module's shapes."""
    keys = jax.random.split(key, 2 + 2 * n_layers)
    params = {}
    params["emb"] = 0.1 * jax.random.normal(keys[0], (K, inp_dim), jnp.float32)
    layers = []
    in_dim = 3 * inp_dim
    for i in range(n_layers):
        w = jax.random.normal(keys[1 + i], (in_dim, units), jnp.float32) / jnp.sqrt(in_dim)
        gamma = jnp.ones((units,), jnp.float32)
        beta = jnp.zeros((units,), jnp.float32)
        layers.append((w, gamma, beta))
        in_dim = units
    params["layers"] = layers
    params["dist_w"] = jax.random.normal(keys[1 + n_layers], (units, size), jnp.float32) / jnp.sqrt(units)
    params["dist_b"] = jnp.zeros((size,), jnp.float32)
    return params


if __name__ == "__main__":
    # Small shapes consistent with the module: features (B, T, inp_dim), K=16
    # default -> L = T - K rows; chosen so N = B*L = 256 gives >= 2 grid steps
    # with tm=128 (keeps both v7x TensorCores busy).
    B, T, inp_dim = 4, 80, 32
    K = 16               # module default
    n_layers, units = 2, 64
    action_shape = (6,)
    size = 1
    for s in action_shape:
        size *= s

    key = jax.random.PRNGKey(0)
    k_feat, k_idx, k_param = jax.random.split(key, 3)

    features = jax.random.normal(k_feat, (B, T, inp_dim), jnp.float32)
    # replaces the in-forward torch.randint(0, K, ...) deterministically
    idx = jax.random.randint(k_idx, (B, T - K), 0, K, dtype=jnp.int32)
    params = init_params(k_param, inp_dim=inp_dim, units=units,
                         n_layers=n_layers, size=size, K=K)

    # TODO(synk): the optional bottleneck / Sinkhorn-Knopp path
    # (use_bottleneck=True) is not implemented; default config only.
    out = bc_action_head_forward(features, idx, params, K=K, unimix_ratio=0.01,
                                 tm=128, matmul_dtype=jnp.float32)
    out = jax.block_until_ready(out)

    ref = _reference_forward(features, idx, params, K=K, unimix_ratio=0.01)
    assert out.shape == (B, T - K, size)
    # tolerance allows the EUP approx reciprocal in the softmax denominator
    assert jnp.allclose(out, ref, atol=2e-3, rtol=2e-3), "mismatch vs reference"

    print("KERNEL_OK")
</pallas_src>

<mosaic_0001>
module attributes {stable_mosaic.version = 11 : i64} {
  func.func @_mlp_head_kernel(%arg0: i32, %arg1: memref<128x32xf32, #tpu.memory_space<vmem>>, %arg2: memref<128x32xf32, #tpu.memory_space<vmem>>, %arg3: memref<128x32xf32, #tpu.memory_space<vmem>>, %arg4: memref<32x128xf32, #tpu.memory_space<vmem>>, %arg5: memref<32x128xf32, #tpu.memory_space<vmem>>, %arg6: memref<32x128xf32, #tpu.memory_space<vmem>>, %arg7: memref<1x128xf32, #tpu.memory_space<vmem>>, %arg8: memref<1x128xf32, #tpu.memory_space<vmem>>, %arg9: memref<128x128xf32, #tpu.memory_space<vmem>>, %arg10: memref<1x128xf32, #tpu.memory_space<vmem>>, %arg11: memref<1x128xf32, #tpu.memory_space<vmem>>, %arg12: memref<128x128xf32, #tpu.memory_space<vmem>>, %arg13: memref<1x128xf32, #tpu.memory_space<vmem>>, %arg14: memref<128x128xf32, #tpu.memory_space<vmem>>) attributes {dimension_semantics = [#tpu.dimension_semantics<parallel>], iteration_bounds = array<i64: 2>, scalar_prefetch = 0 : i64, scratch_operands = 0 : i64, tpu.core_type = #tpu.core_type<tc>, window_params = [{transform_indices = @transform_0, window_bounds = array<i64: 128, 32>}, {transform_indices = @transform_1, window_bounds = array<i64: 128, 32>}, {transform_indices = @transform_2, window_bounds = array<i64: 128, 32>}, {pipeline_mode = #tpu.pipeline_mode<synchronous>, transform_indices = @transform_3, window_bounds = array<i64: 32, 128>}, {pipeline_mode = #tpu.pipeline_mode<synchronous>, transform_indices = @transform_4, window_bounds = array<i64: 32, 128>}, {pipeline_mode = #tpu.pipeline_mode<synchronous>, transform_indices = @transform_5, window_bounds = array<i64: 32, 128>}, {pipeline_mode = #tpu.pipeline_mode<synchronous>, transform_indices = @transform_6, window_bounds = array<i64: 1, 128>}, {pipeline_mode = #tpu.pipeline_mode<synchronous>, transform_indices = @transform_7, window_bounds = array<i64: 1, 128>}, {pipeline_mode = #tpu.pipeline_mode<synchronous>, transform_indices = @transform_8, window_bounds = array<i64: 128, 128>}, {pipeline_mode = #tpu.pipeline_mode<synchronous>, transform_indices = @transform_9, window_bounds = array<i64: 1, 128>}, {pipeline_mode = #tpu.pipeline_mode<synchronous>, transform_indices = @transform_10, window_bounds = array<i64: 1, 128>}, {pipeline_mode = #tpu.pipeline_mode<synchronous>, transform_indices = @transform_11, window_bounds = array<i64: 128, 128>}, {pipeline_mode = #tpu.pipeline_mode<synchronous>, transform_indices = @transform_12, window_bounds = array<i64: 1, 128>}, {transform_indices = @transform_13, window_bounds = array<i64: 128, 128>}]} {
    %0 = tpu.iota {dimensions = array<i32: 1>} : vector<1x128xi32>
    %c64_i32 = arith.constant 64 : i32
    %1 = vector.broadcast %c64_i32 : i32 to vector<1x128xi32>
    %2 = arith.cmpi slt, %0, %1 : vector<1x128xi32>
    %c0 = arith.constant 0 : index
    %c0_0 = arith.constant 0 : index
    %3 = vector.load %arg1[%c0, %c0_0] : memref<128x32xf32, #tpu.memory_space<vmem>>, vector<128x32xf32>
    %c0_1 = arith.constant 0 : index
    %c0_2 = arith.constant 0 : index
    %4 = vector.load %arg4[%c0_1, %c0_2] : memref<32x128xf32, #tpu.memory_space<vmem>>, vector<32x128xf32>
    %cst = arith.constant dense<0.000000e+00> : vector<128x128xf32>
    %5 = tpu.matmul %3, %4, %cst {dimension_numbers = #tpu.dot_dimension_numbers<[1], [0], [0], [1], [0, 0, 1, 1], [], []>} : vector<128x32xf32>, vector<32x128xf32>, vector<128x128xf32> -> vector<128x128xf32>
    %c0_3 = arith.constant 0 : index
    %c0_4 = arith.constant 0 : index
    %6 = vector.load %arg2[%c0_3, %c0_4] : memref<128x32xf32, #tpu.memory_space<vmem>>, vector<128x32xf32>
    %c0_5 = arith.constant 0 : index
    %c0_6 = arith.constant 0 : index
    %7 = vector.load %arg5[%c0_5, %c0_6] : memref<32x128xf32, #tpu.memory_space<vmem>>, vector<32x128xf32>
    %cst_7 = arith.constant dense<0.000000e+00> : vector<128x128xf32>
    %8 = tpu.matmul %6, %7, %cst_7 {dimension_numbers = #tpu.dot_dimension_numbers<[1], [0], [0], [1], [0, 0, 1, 1], [], []>} : vector<128x32xf32>, vector<32x128xf32>, vector<128x128xf32> -> vector<128x128xf32>
    %9 = arith.addf %5, %8 : vector<128x128xf32>
    %c0_8 = arith.constant 0 : index
    %c0_9 = arith.constant 0 : index
    %10 = vector.load %arg3[%c0_8, %c0_9] : memref<128x32xf32, #tpu.memory_space<vmem>>, vector<128x32xf32>
    %c0_10 = arith.constant 0 : index
    %c0_11 = arith.constant 0 : index
    %11 = vector.load %arg6[%c0_10, %c0_11] : memref<32x128xf32, #tpu.memory_space<vmem>>, vector<32x128xf32>
    %cst_12 = arith.constant dense<0.000000e+00> : vector<128x128xf32>
    %12 = tpu.matmul %10, %11, %cst_12 {dimension_numbers = #tpu.dot_dimension_numbers<[1], [0], [0], [1], [0, 0, 1, 1], [], []>} : vector<128x32xf32>, vector<32x128xf32>, vector<128x128xf32> -> vector<128x128xf32>
    %13 = arith.addf %9, %12 : vector<128x128xf32>
    %c0_13 = arith.constant 0 : index
    %c0_14 = arith.constant 0 : index
    %14 = vector.load %arg7[%c0_13, %c0_14] : memref<1x128xf32, #tpu.memory_space<vmem>>, vector<1x128xf32>
    %c0_15 = arith.constant 0 : index
    %c0_16 = arith.constant 0 : index
    %15 = vector.load %arg8[%c0_15, %c0_16] : memref<1x128xf32, #tpu.memory_space<vmem>>, vector<1x128xf32>
    %cst_17 = arith.constant dense<0.000000e+00> : vector<128xf32>
    %16 = vector.multi_reduction <add>, %13, %cst_17 [1] : vector<128x128xf32> to vector<128xf32>
    %17 = vector.shape_cast %16 : vector<128xf32> to vector<128x1xf32>
    %cst_18 = arith.constant 1.562500e-02 : f32
    %18 = vector.broadcast %cst_18 : f32 to vector<128x1xf32>
    %19 = arith.mulf %17, %18 : vector<128x1xf32>
    %20 = vector.broadcast %19 : vector<128x1xf32> to vector<128x128xf32>
    %21 = arith.subf %13, %20 : vector<128x128xf32>
    %cst_19 = arith.constant 0.000000e+00 : f32
    %22 = vector.shape_cast %2 : vector<1x128xi1> to vector<1x128xi1>
    %23 = vector.broadcast %22 : vector<1x128xi1> to vector<128x128xi1>
    %24 = vector.broadcast %cst_19 : f32 to vector<128x128xf32>
    %25 = arith.select %23, %21, %24 : vector<128x128xi1>, vector<128x128xf32>
    %26 = arith.mulf %25, %25 : vector<128x128xf32>
    %cst_20 = arith.constant dense<0.000000e+00> : vector<128xf32>
    %27 = vector.multi_reduction <add>, %26, %cst_20 [1] : vector<128x128xf32> to vector<128xf32>
    %28 = vector.shape_cast %27 : vector<128xf32> to vector<128x1xf32>
    %cst_21 = arith.constant 1.562500e-02 : f32
    %29 = vector.broadcast %cst_21 : f32 to vector<128x1xf32>
    %30 = arith.mulf %28, %29 : vector<128x1xf32>
    %cst_22 = arith.constant 1.000000e-03 : f32
    %31 = vector.broadcast %cst_22 : f32 to vector<128x1xf32>
    %32 = arith.addf %30, %31 : vector<128x1xf32>
    %33 = math.rsqrt %32 : vector<128x1xf32>
    %34 = vector.broadcast %33 : vector<128x1xf32> to vector<128x128xf32>
    %35 = arith.mulf %25, %34 : vector<128x128xf32>
    %36 = vector.broadcast %14 : vector<1x128xf32> to vector<128x128xf32>
    %37 = arith.mulf %35, %36 : vector<128x128xf32>
    %38 = vector.broadcast %15 : vector<1x128xf32> to vector<128x128xf32>
    %39 = arith.addf %37, %38 : vector<128x128xf32>
    %cst_23 = arith.constant 0.000000e+00 : f32
    %40 = vector.broadcast %cst_23 : f32 to vector<128x128xf32>
    %41 = arith.cmpf ogt, %39, %40 : vector<128x128xf32>
    %42 = math.exp %39 : vector<128x128xf32>
    %cst_24 = arith.constant 1.000000e+00 : f32
    %43 = vector.broadcast %cst_24 : f32 to vector<128x128xf32>
    %44 = arith.subf %42, %43 : vector<128x128xf32>
    %45 = arith.select %41, %39, %44 : vector<128x128xi1>, vector<128x128xf32>
    %c0_25 = arith.constant 0 : index
    %c0_26 = arith.constant 0 : index
    %46 = vector.load %arg9[%c0_25, %c0_26] : memref<128x128xf32, #tpu.memory_space<vmem>>, vector<128x128xf32>
    %cst_27 = arith.constant dense<0.000000e+00> : vector<128x128xf32>
    %47 = tpu.matmul %45, %46, %cst_27 {dimension_numbers = #tpu.dot_dimension_numbers<[1], [0], [0], [1], [0, 0, 1, 1], [], []>} : vector<128x128xf32>, vector<128x128xf32>, vector<128x128xf32> -> vector<128x128xf32>
    %c0_28 = arith.constant 0 : index
    %c0_29 = arith.constant 0 : index
    %48 = vector.load %arg10[%c0_28, %c0_29] : memref<1x128xf32, #tpu.memory_space<vmem>>, vector<1x128xf32>
    %c0_30 = arith.constant 0 : index
    %c0_31 = arith.constant 0 : index
    %49 = vector.load %arg11[%c0_30, %c0_31] : memref<1x128xf32, #tpu.memory_space<vmem>>, vector<1x128xf32>
    %cst_32 = arith.constant dense<0.000000e+00> : vector<128xf32>
    %50 = vector.multi_reduction <add>, %47, %cst_32 [1] : vector<128x128xf32> to vector<128xf32>
    %51 = vector.shape_cast %50 : vector<128xf32> to vector<128x1xf32>
    %cst_33 = arith.constant 1.562500e-02 : f32
    %52 = vector.broadcast %cst_33 : f32 to vector<128x1xf32>
    %53 = arith.mulf %51, %52 : vector<128x1xf32>
    %54 = vector.broadcast %53 : vector<128x1xf32> to vector<128x128xf32>
    %55 = arith.subf %47, %54 : vector<128x128xf32>
    %cst_34 = arith.constant 0.000000e+00 : f32
    %56 = vector.shape_cast %2 : vector<1x128xi1> to vector<1x128xi1>
    %57 = vector.broadcast %56 : vector<1x128xi1> to vector<128x128xi1>
    %58 = vector.broadcast %cst_34 : f32 to vector<128x128xf32>
    %59 = arith.select %57, %55, %58 : vector<128x128xi1>, vector<128x128xf32>
    %60 = arith.mulf %59, %59 : vector<128x128xf32>
    %cst_35 = arith.constant dense<0.000000e+00> : vector<128xf32>
    %61 = vector.multi_reduction <add>, %60, %cst_35 [1] : vector<128x128xf32> to vector<128xf32>
    %62 = vector.shape_cast %61 : vector<128xf32> to vector<128x1xf32>
    %cst_36 = arith.constant 1.562500e-02 : f32
    %63 = vector.broadcast %cst_36 : f32 to vector<128x1xf32>
    %64 = arith.mulf %62, %63 : vector<128x1xf32>
    %cst_37 = arith.constant 1.000000e-03 : f32
    %65 = vector.broadcast %cst_37 : f32 to vector<128x1xf32>
    %66 = arith.addf %64, %65 : vector<128x1xf32>
    %67 = math.rsqrt %66 : vector<128x1xf32>
    %68 = vector.broadcast %67 : vector<128x1xf32> to vector<128x128xf32>
    %69 = arith.mulf %59, %68 : vector<128x128xf32>
    %70 = vector.broadcast %48 : vector<1x128xf32> to vector<128x128xf32>
    %71 = arith.mulf %69, %70 : vector<128x128xf32>
    %72 = vector.broadcast %49 : vector<1x128xf32> to vector<128x128xf32>
    %73 = arith.addf %71, %72 : vector<128x128xf32>
    %cst_38 = arith.constant 0.000000e+00 : f32
    %74 = vector.broadcast %cst_38 : f32 to vector<128x128xf32>
    %75 = arith.cmpf ogt, %73, %74 : vector<128x128xf32>
    %76 = math.exp %73 : vector<128x128xf32>
    %cst_39 = arith.constant 1.000000e+00 : f32
    %77 = vector.broadcast %cst_39 : f32 to vector<128x128xf32>
    %78 = arith.subf %76, %77 : vector<128x128xf32>
    %79 = arith.select %75, %73, %78 : vector<128x128xi1>, vector<128x128xf32>
    %c0_40 = arith.constant 0 : index
    %c0_41 = arith.constant 0 : index
    %80 = vector.load %arg12[%c0_40, %c0_41] : memref<128x128xf32, #tpu.memory_space<vmem>>, vector<128x128xf32>
    %cst_42 = arith.constant dense<0.000000e+00> : vector<128x128xf32>
    %81 = tpu.matmul %79, %80, %cst_42 {dimension_numbers = #tpu.dot_dimension_numbers<[1], [0], [0], [1], [0, 0, 1, 1], [], []>} : vector<128x128xf32>, vector<128x128xf32>, vector<128x128xf32> -> vector<128x128xf32>
    %c0_43 = arith.constant 0 : index
    %c0_44 = arith.constant 0 : index
    %82 = vector.load %arg13[%c0_43, %c0_44] : memref<1x128xf32, #tpu.memory_space<vmem>>, vector<1x128xf32>
    %83 = vector.broadcast %82 : vector<1x128xf32> to vector<128x128xf32>
    %84 = arith.addf %81, %83 : vector<128x128xf32>
    %85 = tpu.iota {dimensions = array<i32: 1>} : vector<1x128xi32>
    %c6_i32 = arith.constant 6 : i32
    %86 = vector.broadcast %c6_i32 : i32 to vector<1x128xi32>
    %87 = arith.cmpi slt, %85, %86 : vector<1x128xi32>
    %cst_45 = arith.constant -1.000000e+30 : f32
    %88 = vector.shape_cast %87 : vector<1x128xi1> to vector<1x128xi1>
    %89 = vector.broadcast %88 : vector<1x128xi1> to vector<128x128xi1>
    %90 = vector.broadcast %cst_45 : f32 to vector<128x128xf32>
    %91 = arith.select %89, %84, %90 : vector<128x128xi1>, vector<128x128xf32>
    %cst_46 = arith.constant dense<0xFF800000> : vector<128xf32>
    %92 = vector.multi_reduction <maximumf>, %91, %cst_46 [1] : vector<128x128xf32> to vector<128xf32>
    %93 = vector.shape_cast %92 : vector<128xf32> to vector<128x1xf32>
    %94 = vector.broadcast %93 : vector<128x1xf32> to vector<128x128xf32>
    %95 = arith.subf %91, %94 : vector<128x128xf32>
    %96 = math.exp %95 : vector<128x128xf32>
    %cst_47 = arith.constant dense<0.000000e+00> : vector<128xf32>
    %97 = vector.multi_reduction <add>, %96, %cst_47 [1] : vector<128x128xf32> to vector<128xf32>
    %98 = vector.shape_cast %97 : vector<128xf32> to vector<128x1xf32>
    %99 = tpu.reciprocal %98 {approx = true} : vector<128x1xf32> -> vector<128x1xf32>
    %100 = vector.broadcast %99 : vector<128x1xf32> to vector<128x128xf32>
    %101 = arith.mulf %96, %100 : vector<128x128xf32>
    %cst_48 = arith.constant 9.900000e-01 : f32
    %102 = vector.broadcast %cst_48 : f32 to vector<128x128xf32>
    %103 = arith.mulf %101, %102 : vector<128x128xf32>
    %cst_49 = arith.constant 0.00166666671 : f32
    %104 = vector.broadcast %cst_49 : f32 to vector<128x128xf32>
    %105 = arith.addf %103, %104 : vector<128x128xf32>
    %106 = math.log %105 : vector<128x128xf32>
    %c0_50 = arith.constant 0 : index
    %c0_51 = arith.constant 0 : index
    %107 = vector.load %arg14[%c0_50, %c0_51] : memref<128x128xf32, #tpu.memory_space<vmem>>, vector<128x128xf32>
    tpu.vector_store %arg14[%c0_50, %c0_51], %106 {strides = array<i32>} : memref<128x128xf32, #tpu.memory_space<vmem>>, vector<128x128xf32>,
    return
  }
  func.func @transform_0(%arg0: i32) -> (i32, i32) {
    %c0_i32 = arith.constant 0 : i32
    %c0_i32_0 = arith.constant 0 : i32
    return %arg0, %c0_i32 : i32, i32
  }
  func.func @transform_1(%arg0: i32) -> (i32, i32) {
    %c0_i32 = arith.constant 0 : i32
    %c0_i32_0 = arith.constant 0 : i32
    return %arg0, %c0_i32 : i32, i32
  }
  func.func @transform_2(%arg0: i32) -> (i32, i32) {
    %c0_i32 = arith.constant 0 : i32
    %c0_i32_0 = arith.constant 0 : i32
    return %arg0, %c0_i32 : i32, i32
  }
  func.func @transform_3(%arg0: i32) -> (i32, i32) {
    %c0_i32 = arith.constant 0 : i32
    %c0_i32_0 = arith.constant 0 : i32
    %c0_i32_1 = arith.constant 0 : i32
    return %c0_i32, %c0_i32_0 : i32, i32
  }
  func.func @transform_4(%arg0: i32) -> (i32, i32) {
    %c0_i32 = arith.constant 0 : i32
    %c0_i32_0 = arith.constant 0 : i32
    %c0_i32_1 = arith.constant 0 : i32
    return %c0_i32, %c0_i32_0 : i32, i32
  }
  func.func @transform_5(%arg0: i32) -> (i32, i32) {
    %c0_i32 = arith.constant 0 : i32
    %c0_i32_0 = arith.constant 0 : i32
    %c0_i32_1 = arith.constant 0 : i32
    return %c0_i32, %c0_i32_0 : i32, i32
  }
  func.func @transform_6(%arg0: i32) -> (i32, i32) {
    %c0_i32 = arith.constant 0 : i32
    %c0_i32_0 = arith.constant 0 : i32
    %c0_i32_1 = arith.constant 0 : i32
    return %c0_i32, %c0_i32_0 : i32, i32
  }
  func.func @transform_7(%arg0: i32) -> (i32, i32) {
    %c0_i32 = arith.constant 0 : i32
    %c0_i32_0 = arith.constant 0 : i32
    %c0_i32_1 = arith.constant 0 : i32
    return %c0_i32, %c0_i32_0 : i32, i32
  }
  func.func @transform_8(%arg0: i32) -> (i32, i32) {
    %c0_i32 = arith.constant 0 : i32
    %c0_i32_0 = arith.constant 0 : i32
    %c0_i32_1 = arith.constant 0 : i32
    return %c0_i32, %c0_i32_0 : i32, i32
  }
  func.func @transform_9(%arg0: i32) -> (i32, i32) {
    %c0_i32 = arith.constant 0 : i32
    %c0_i32_0 = arith.constant 0 : i32
    %c0_i32_1 = arith.constant 0 : i32
    return %c0_i32, %c0_i32_0 : i32, i32
  }
  func.func @transform_10(%arg0: i32) -> (i32, i32) {
    %c0_i32 = arith.constant 0 : i32
    %c0_i32_0 = arith.constant 0 : i32
    %c0_i32_1 = arith.constant 0 : i32
    return %c0_i32, %c0_i32_0 : i32, i32
  }
  func.func @transform_11(%arg0: i32) -> (i32, i32) {
    %c0_i32 = arith.constant 0 : i32
    %c0_i32_0 = arith.constant 0 : i32
    %c0_i32_1 = arith.constant 0 : i32
    return %c0_i32, %c0_i32_0 : i32, i32
  }
  func.func @transform_12(%arg0: i32) -> (i32, i32) {
    %c0_i32 = arith.constant 0 : i32
    %c0_i32_0 = arith.constant 0 : i32
    %c0_i32_1 = arith.constant 0 : i32
    return %c0_i32, %c0_i32_0 : i32, i32
  }
  func.func @transform_13(%arg0: i32) -> (i32, i32) {
    %c0_i32 = arith.constant 0 : i32
    %c0_i32_0 = arith.constant 0 : i32
    return %arg0, %c0_i32 : i32, i32
  }
}

</mosaic_0001>

<llo_original>
// kernel: tpu_custom_call.1
$region0: #{tpu_custom_call.1}
  #allocation0 [shape = 'u32[]', space=smem, size = 0x4, offset = 0x4, fixed_abs, tag = 'smem constant byte address 0x4 - core index']
  #allocation1 [shape = 'u32[144,128]{1,0:T(1,128)}', space=vmem, size = 0x12000, scoped, tag = 'internal scratch']
  %s0 = inlined_call_operand.vmem [shape: f32[256,32], index: 0, kind: input, shape index: {}]
  %s1 = inlined_call_operand.vmem [shape: f32[256,32], index: 1, kind: input, shape index: {}]
  %s2 = inlined_call_operand.vmem [shape: f32[256,32], index: 2, kind: input, shape index: {}]
  %s3 = inlined_call_operand.vmem [shape: f32[32,128], index: 3, kind: input, shape index: {}]
  %s4 = inlined_call_operand.vmem [shape: f32[32,128], index: 4, kind: input, shape index: {}]
  %s5 = inlined_call_operand.vmem [shape: f32[32,128], index: 5, kind: input, shape index: {}]
  %s6 = inlined_call_operand.vmem [shape: f32[1,128], index: 6, kind: input, shape index: {}]
  %s7 = inlined_call_operand.vmem [shape: f32[1,128], index: 7, kind: input, shape index: {}]
  %s8 = inlined_call_operand.vmem [shape: f32[128,128], index: 8, kind: input, shape index: {}]
  %s9 = inlined_call_operand.vmem [shape: f32[1,128], index: 9, kind: input, shape index: {}]
  %s10 = inlined_call_operand.vmem [shape: f32[1,128], index: 10, kind: input, shape index: {}]
  %s11 = inlined_call_operand.vmem [shape: f32[128,128], index: 11, kind: input, shape index: {}]
  %s12 = inlined_call_operand.vmem [shape: f32[1,128], index: 12, kind: input, shape index: {}]
  %s13 = inlined_call_operand.hbm [shape: f32[256,128], index: 13, kind: output, shape index: {}]
  %s14 = sld [smem:[#allocation0]]
  $region85: #{tpu_custom_call.1} parent=0
    _
  %s16 = ssub.s32 1, %s14
  %s17 = scalar_select 0, %s16, %s14
  $region1: #{tpu_custom_call.1} parent=0
    #allocation2 [shape = 'u8[131072]{0}', space=vmem, size = 0x20000, scoped, tag = 'output window, operand 0']
    #allocation3 [shape = 's32[2]{0}', space=sflag, size = 0x8, scoped, tag = 'scoped memory for tpu_custom_call.1']
    %18 = vsyncpa [#allocation3], 0
    %s19 = scalar_lea.sflag [#allocation3], 1
    %20 = vsyncpa %s19, 0
    loop: start=0, step=1, limit=4
    $region2: #{tpu_custom_call.1} parent=1 // loop_pre_header
      _
    $region3: #{tpu_custom_call.1} parent=1 // loop_header
      %s22 = sphi 0, %s26
      %p23 = scmp.ge.s32.totalorder %s22, 4
      %s32 = sphi 0, %s34
      %s35 = sphi 0, %s32
      %s36 = sphi 0, %s35
      %s52 = sphi 0, %s36
      %s58 = sphi 0, %s60
      %s61 = sphi 0, %s58
      %s62 = sphi 0, %s61
      %s78 = sphi 0, %s62
      %s84 = sphi 0, %s86
      %s87 = sphi 0, %s84
      %s88 = sphi 0, %s87
      %s104 = sphi 0, %s88
      %s108 = sphi 0, %s108
      %s110 = sphi 0, %s108
      %s111 = sphi 0, %s110
      %s125 = sphi 0, %s111
      %s129 = sphi 0, %s129
      %s131 = sphi 0, %s129
      %s132 = sphi 0, %s131
      %s146 = sphi 0, %s132
      %s150 = sphi 0, %s150
      %s152 = sphi 0, %s150
      %s153 = sphi 0, %s152
      %s167 = sphi 0, %s153
      %s171 = sphi 0, %s171
      %s173 = sphi 0, %s171
      %s174 = sphi 0, %s173
      %s188 = sphi 0, %s174
      %s192 = sphi 0, %s192
      %s194 = sphi 0, %s192
      %s195 = sphi 0, %s194
      %s209 = sphi 0, %s195
      %s213 = sphi 0, %s213
      %s215 = sphi 0, %s213
      %s216 = sphi 0, %s215
      %s230 = sphi 0, %s216
      %s234 = sphi 0, %s234
      %s236 = sphi 0, %s234
      %s237 = sphi 0, %s236
      %s251 = sphi 0, %s237
      %s255 = sphi 0, %s255
      %s257 = sphi 0, %s255
      %s258 = sphi 0, %s257
      %s272 = sphi 0, %s258
      %s276 = sphi 0, %s276
      %s278 = sphi 0, %s276
      %s279 = sphi 0, %s278
      %s293 = sphi 0, %s279
      %s297 = sphi 0, %s297
      %s299 = sphi 0, %s297
      %s300 = sphi 0, %s299
      %s314 = sphi 0, %s300
      %s320 = sphi 0, %s322
      %s323 = sphi 0, %s320
      %s324 = sphi 0, %s323
      %s340 = sphi 0, %s324
    $region4: #{tpu_custom_call.1} parent=1 // loop_header_branch
      %25 = sbr.rel (%p23) target = $region8
    $region5: #{tpu_custom_call.1} parent=1 // loop_body
      %s27 = ssub.s32 %s22, 1
      %s28 = ssub.s32 %s22, 2
      %s29 = sadd.s32 %s22, 1
      %s30 = ssub.s32 %s22, %s29
      %p31 = scmp.eq.s32.totalorder %s30, 0
      %s33 = sadd.s32 %s32, 1
      %s34 = scalar_select %p31, %s32, %s33
      %p37 = pneg %p31
      %p38 = scmp.eq.s32.totalorder %s22, 1
      %p39 = por %p37, %p38
      %p40 = scmp.ne.s32.totalorder %s32, %s35
      %p41 = scmp.eq.s32.totalorder %s22, 0
      %p42 = por %p40, %p41
      %p43 = scmp.ne.s32.totalorder %s32, %s35
      %p44 = scmp.eq.s32.totalorder %s27, 1
      %p45 = por %p43, %p44
      %p46 = scmp.ne.s32.totalorder %s35, %s36
      %p47 = scmp.eq.s32.totalorder %s27, 0
      %p48 = por %p46, %p47
      %p49 = scmp.ne.s32.totalorder %s35, %s36
      %p50 = scmp.eq.s32.totalorder %s28, 1
      %p51 = por %p49, %p50
      %p53 = scmp.ne.s32.totalorder %s36, %s52
      %p54 = scmp.eq.s32.totalorder %s28, 0
      %p55 = por %p53, %p54
      %s56 = ssub.s32 %s22, %s29
      %p57 = scmp.eq.s32.totalorder %s56, 0
      %s59 = sadd.s32 %s58, 1
      %s60 = scalar_select %p57, %s58, %s59
      %p63 = pneg %p57
      %p64 = scmp.eq.s32.totalorder %s22, 1
      %p65 = por %p63, %p64
      %p66 = scmp.ne.s32.totalorder %s58, %s61
      %p67 = scmp.eq.s32.totalorder %s22, 0
      %p68 = por %p66, %p67
      %p69 = scmp.ne.s32.totalorder %s58, %s61
      %p70 = scmp.eq.s32.totalorder %s27, 1
      %p71 = por %p69, %p70
      %p72 = scmp.ne.s32.totalorder %s61, %s62
      %p73 = scmp.eq.s32.totalorder %s27, 0
      %p74 = por %p72, %p73
      %p75 = scmp.ne.s32.totalorder %s61, %s62
      %p76 = scmp.eq.s32.totalorder %s28, 1
      %p77 = por %p75, %p76
      %p79 = scmp.ne.s32.totalorder %s62, %s78
      %p80 = scmp.eq.s32.totalorder %s28, 0
      %p81 = por %p79, %p80
      %s82 = ssub.s32 %s22, %s29
      %p83 = scmp.eq.s32.totalorder %s82, 0
      %s85 = sadd.s32 %s84, 1
      %s86 = scalar_select %p83, %s84, %s85
      %p89 = pneg %p83
      %p90 = scmp.eq.s32.totalorder %s22, 1
      %p91 = por %p89, %p90
      %p92 = scmp.ne.s32.totalorder %s84, %s87
      %p93 = scmp.eq.s32.totalorder %s22, 0
      %p94 = por %p92, %p93
      %p95 = scmp.ne.s32.totalorder %s84, %s87
      %p96 = scmp.eq.s32.totalorder %s27, 1
      %p97 = por %p95, %p96
      %p98 = scmp.ne.s32.totalorder %s87, %s88
      %p99 = scmp.eq.s32.totalorder %s27, 0
      %p100 = por %p98, %p99
      %p101 = scmp.ne.s32.totalorder %s87, %s88
      %p102 = scmp.eq.s32.totalorder %s28, 1
      %p103 = por %p101, %p102
      %p105 = scmp.ne.s32.totalorder %s88, %s104
      %p106 = scmp.eq.s32.totalorder %s28, 0
      %p107 = por %p105, %p106
      %s109 = sadd.s32 %s108, 1
      %p112 = scmp.eq.s32.totalorder %s22, 1
      %p113 = scmp.ne.s32.totalorder %s108, %s110
      %p114 = scmp.eq.s32.totalorder %s22, 0
      %p115 = por %p113, %p114
      %p116 = scmp.ne.s32.totalorder %s108, %s110
      %p117 = scmp.eq.s32.totalorder %s27, 1
      %p118 = por %p116, %p117
      %p119 = scmp.ne.s32.totalorder %s110, %s111
      %p120 = scmp.eq.s32.totalorder %s27, 0
      %p121 = por %p119, %p120
      %p122 = scmp.ne.s32.totalorder %s110, %s111
      %p123 = scmp.eq.s32.totalorder %s28, 1
      %p124 = por %p122, %p123
      %p126 = scmp.ne.s32.totalorder %s111, %s125
      %p127 = scmp.eq.s32.totalorder %s28, 0
      %p128 = por %p126, %p127
      %s130 = sadd.s32 %s129, 1
      %p133 = scmp.eq.s32.totalorder %s22, 1
      %p134 = scmp.ne.s32.totalorder %s129, %s131
      %p135 = scmp.eq.s32.totalorder %s22, 0
      %p136 = por %p134, %p135
      %p137 = scmp.ne.s32.totalorder %s129, %s131
      %p138 = scmp.eq.s32.totalorder %s27, 1
      %p139 = por %p137, %p138
      %p140 = scmp.ne.s32.totalorder %s131, %s132
      %p141 = scmp.eq.s32.totalorder %s27, 0
      %p142 = por %p140, %p141
      %p143 = scmp.ne.s32.totalorder %s131, %s132
      %p144 = scmp.eq.s32.totalorder %s28, 1
      %p145 = por %p143, %p144
      %p147 = scmp.ne.s32.totalorder %s132, %s146
      %p148 = scmp.eq.s32.totalorder %s28, 0
      %p149 = por %p147, %p148
      %s151 = sadd.s32 %s150, 1
      %p154 = scmp.eq.s32.totalorder %s22, 1
      %p155 = scmp.ne.s32.totalorder %s150, %s152
      %p156 = scmp.eq.s32.totalorder %s22, 0
      %p157 = por %p155, %p156
      %p158 = scmp.ne.s32.totalorder %s150, %s152
      %p159 = scmp.eq.s32.totalorder %s27, 1
      %p160 = por %p158, %p159
      %p161 = scmp.ne.s32.totalorder %s152, %s153
      %p162 = scmp.eq.s32.totalorder %s27, 0
      %p163 = por %p161, %p162
      %p164 = scmp.ne.s32.totalorder %s152, %s153
      %p165 = scmp.eq.s32.totalorder %s28, 1
      %p166 = por %p164, %p165
      %p168 = scmp.ne.s32.totalorder %s153, %s167
      %p169 = scmp.eq.s32.totalorder %s28, 0
      %p170 = por %p168, %p169
      %s172 = sadd.s32 %s171, 1
      %p175 = scmp.eq.s32.totalorder %s22, 1
      %p176 = scmp.ne.s32.totalorder %s171, %s173
      %p177 = scmp.eq.s32.totalorder %s22, 0
      %p178 = por %p176, %p177
      %p179 = scmp.ne.s32.totalorder %s171, %s173
      %p180 = scmp.eq.s32.totalorder %s27, 1
      %p181 = por %p179, %p180
      %p182 = scmp.ne.s32.totalorder %s173, %s174
      %p183 = scmp.eq.s32.totalorder %s27, 0
      %p184 = por %p182, %p183
      %p185 = scmp.ne.s32.totalorder %s173, %s174
      %p186 = scmp.eq.s32.totalorder %s28, 1
      %p187 = por %p185, %p186
      %p189 = scmp.ne.s32.totalorder %s174, %s188
      %p190 = scmp.eq.s32.totalorder %s28, 0
      %p191 = por %p189, %p190
      %s193 = sadd.s32 %s192, 1
      %p196 = scmp.eq.s32.totalorder %s22, 1
      %p197 = scmp.ne.s32.totalorder %s192, %s194
      %p198 = scmp.eq.s32.totalorder %s22, 0
      %p199 = por %p197, %p198
      %p200 = scmp.ne.s32.totalorder %s192, %s194
      %p201 = scmp.eq.s32.totalorder %s27, 1
      %p202 = por %p200, %p201
      %p203 = scmp.ne.s32.totalorder %s194, %s195
      %p204 = scmp.eq.s32.totalorder %s27, 0
      %p205 = por %p203, %p204
      %p206 = scmp.ne.s32.totalorder %s194, %s195
      %p207 = scmp.eq.s32.totalorder %s28, 1
      %p208 = por %p206, %p207
      %p210 = scmp.ne.s32.totalorder %s195, %s209
      %p211 = scmp.eq.s32.totalorder %s28, 0
      %p212 = por %p210, %p211
      %s214 = sadd.s32 %s213, 1
      %p217 = scmp.eq.s32.totalorder %s22, 1
      %p218 = scmp.ne.s32.totalorder %s213, %s215
      %p219 = scmp.eq.s32.totalorder %s22, 0
      %p220 = por %p218, %p219
      %p221 = scmp.ne.s32.totalorder %s213, %s215
      %p222 = scmp.eq.s32.totalorder %s27, 1
      %p223 = por %p221, %p222
      %p224 = scmp.ne.s32.totalorder %s215, %s216
      %p225 = scmp.eq.s32.totalorder %s27, 0
      %p226 = por %p224, %p225
      %p227 = scmp.ne.s32.totalorder %s215, %s216
      %p228 = scmp.eq.s32.totalorder %s28, 1
      %p229 = por %p227, %p228
      %p231 = scmp.ne.s32.totalorder %s216, %s230
      %p232 = scmp.eq.s32.totalorder %s28, 0
      %p233 = por %p231, %p232
      %s235 = sadd.s32 %s234, 1
      %p238 = scmp.eq.s32.totalorder %s22, 1
      %p239 = scmp.ne.s32.totalorder %s234, %s236
      %p240 = scmp.eq.s32.totalorder %s22, 0
      %p241 = por %p239, %p240
      %p242 = scmp.ne.s32.totalorder %s234, %s236
      %p243 = scmp.eq.s32.totalorder %s27, 1
      %p244 = por %p242, %p243
      %p245 = scmp.ne.s32.totalorder %s236, %s237
      %p246 = scmp.eq.s32.totalorder %s27, 0
      %p247 = por %p245, %p246
      %p248 = scmp.ne.s32.totalorder %s236, %s237
      %p249 = scmp.eq.s32.totalorder %s28, 1
      %p250 = por %p248, %p249
      %p252 = scmp.ne.s32.totalorder %s237, %s251
      %p253 = scmp.eq.s32.totalorder %s28, 0
      %p254 = por %p252, %p253
      %s256 = sadd.s32 %s255, 1
      %p259 = scmp.eq.s32.totalorder %s22, 1
      %p260 = scmp.ne.s32.totalorder %s255, %s257
      %p261 = scmp.eq.s32.totalorder %s22, 0
      %p262 = por %p260, %p261
      %p263 = scmp.ne.s32.totalorder %s255, %s257
      %p264 = scmp.eq.s32.totalorder %s27, 1
      %p265 = por %p263, %p264
      %p266 = scmp.ne.s32.totalorder %s257, %s258
      %p267 = scmp.eq.s32.totalorder %s27, 0
      %p268 = por %p266, %p267
      %p269 = scmp.ne.s32.totalorder %s257, %s258
      %p270 = scmp.eq.s32.totalorder %s28, 1
      %p271 = por %p269, %p270
      %p273 = scmp.ne.s32.totalorder %s258, %s272
      %p274 = scmp.eq.s32.totalorder %s28, 0
      %p275 = por %p273, %p274
      %s277 = sadd.s32 %s276, 1
      %p280 = scmp.eq.s32.totalorder %s22, 1
      %p281 = scmp.ne.s32.totalorder %s276, %s278
      %p282 = scmp.eq.s32.totalorder %s22, 0
      %p283 = por %p281, %p282
      %p284 = scmp.ne.s32.totalorder %s276, %s278
      %p285 = scmp.eq.s32.totalorder %s27, 1
      %p286 = por %p284, %p285
      %p287 = scmp.ne.s32.totalorder %s278, %s279
      %p288 = scmp.eq.s32.totalorder %s27, 0
      %p289 = por %p287, %p288
      %p290 = scmp.ne.s32.totalorder %s278, %s279
      %p291 = scmp.eq.s32.totalorder %s28, 1
      %p292 = por %p290, %p291
      %p294 = scmp.ne.s32.totalorder %s279, %s293
      %p295 = scmp.eq.s32.totalorder %s28, 0
      %p296 = por %p294, %p295
      %s298 = sadd.s32 %s297, 1
      %p301 = scmp.eq.s32.totalorder %s22, 1
      %p302 = scmp.ne.s32.totalorder %s297, %s299
      %p303 = scmp.eq.s32.totalorder %s22, 0
      %p304 = por %p302, %p303
      %p305 = scmp.ne.s32.totalorder %s297, %s299
      %p306 = scmp.eq.s32.totalorder %s27, 1
      %p307 = por %p305, %p306
      %p308 = scmp.ne.s32.totalorder %s299, %s300
      %p309 = scmp.eq.s32.totalorder %s27, 0
      %p310 = por %p308, %p309
      %p311 = scmp.ne.s32.totalorder %s299, %s300
      %p312 = scmp.eq.s32.totalorder %s28, 1
      %p313 = por %p311, %p312
      %p315 = scmp.ne.s32.totalorder %s300, %s314
      %p316 = scmp.eq.s32.totalorder %s28, 0
      %p317 = por %p315, %p316
      %s318 = ssub.s32 %s22, %s29
      %p319 = scmp.eq.s32.totalorder %s318, 0
      %s321 = sadd.s32 %s320, 1
      %s322 = scalar_select %p319, %s320, %s321
      %p325 = pneg %p319
      %p326 = scmp.eq.s32.totalorder %s22, 1
      %p327 = por %p325, %p326
      %p328 = scmp.ne.s32.totalorder %s320, %s323
      %p329 = scmp.eq.s32.totalorder %s22, 0
      %p330 = por %p328, %p329
      %p331 = scmp.ne.s32.totalorder %s320, %s323
      %p332 = scmp.eq.s32.totalorder %s27, 1
      %p333 = por %p331, %p332
      %p334 = scmp.ne.s32.totalorder %s323, %s324
      %p335 = scmp.eq.s32.totalorder %s27, 0
      %p336 = por %p334, %p335
      %p337 = scmp.ne.s32.totalorder %s323, %s324
      %p338 = scmp.eq.s32.totalorder %s28, 1
      %p339 = por %p337, %p338
      %p341 = scmp.ne.s32.totalorder %s324, %s340
      %p342 = scmp.eq.s32.totalorder %s28, 0
      %p343 = por %p341, %p342
      %p344 = scmp.le.s32.totalorder 1, %s22
      %p345 = scmp.lt.s32.totalorder %s22, 3
      %p346 = pnand %p344, %p345
      %p347 = pneg %p346
      // Predicated region
      $region9: #{tpu_custom_call.1} parent=5 // pred_check
        _
      $region10: #{tpu_custom_call.1} parent=5 // pred_check_branch
        %349 = sbr.rel (%p346) target = $region12
      $region11: #{tpu_custom_call.1} parent=5 // pred_region
        %s350 = ssub.s32 %s22, 1
        // Predicated region
        $region13: #{tpu_custom_call.1} parent=11 // pred_check
          %p351 = pneg %p121
        $region14: #{tpu_custom_call.1} parent=11 // pred_check_branch
          %353 = sbr.rel (%p351) target = $region16
        $region15: #{tpu_custom_call.1} parent=11 // pred_region
          _
        $region16: #{tpu_custom_call.1} parent=11 // pred_fallthru
          _
        // Predicated region
        $region17: #{tpu_custom_call.1} parent=11 // pred_check
          %p354 = pneg %p142
        $region18: #{tpu_custom_call.1} parent=11 // pred_check_branch
          %356 = sbr.rel (%p354) target = $region20
        $region19: #{tpu_custom_call.1} parent=11 // pred_region
          _
        $region20: #{tpu_custom_call.1} parent=11 // pred_fallthru
          _
        // Predicated region
        $region21: #{tpu_custom_call.1} parent=11 // pred_check
          %p357 = pneg %p163
        $region22: #{tpu_custom_call.1} parent=11 // pred_check_branch
          %359 = sbr.rel (%p357) target = $region24
        $region23: #{tpu_custom_call.1} parent=11 // pred_region
          _
        $region24: #{tpu_custom_call.1} parent=11 // pred_fallthru
          _
        // Predicated region
        $region25: #{tpu_custom_call.1} parent=11 // pred_check
          %p360 = pneg %p184
        $region26: #{tpu_custom_call.1} parent=11 // pred_check_branch
          %362 = sbr.rel (%p360) target = $region28
        $region27: #{tpu_custom_call.1} parent=11 // pred_region
          _
        $region28: #{tpu_custom_call.1} parent=11 // pred_fallthru
          _
        // Predicated region
        $region29: #{tpu_custom_call.1} parent=11 // pred_check
          %p363 = pneg %p205
        $region30: #{tpu_custom_call.1} parent=11 // pred_check_branch
          %365 = sbr.rel (%p363) target = $region32
        $region31: #{tpu_custom_call.1} parent=11 // pred_region
          _
        $region32: #{tpu_custom_call.1} parent=11 // pred_fallthru
          _
        // Predicated region
        $region33: #{tpu_custom_call.1} parent=11 // pred_check
          %p366 = pneg %p226
        $region34: #{tpu_custom_call.1} parent=11 // pred_check_branch
          %368 = sbr.rel (%p366) target = $region36
        $region35: #{tpu_custom_call.1} parent=11 // pred_region
          _
        $region36: #{tpu_custom_call.1} parent=11 // pred_fallthru
          _
        // Predicated region
        $region37: #{tpu_custom_call.1} parent=11 // pred_check
          %p369 = pneg %p247
        $region38: #{tpu_custom_call.1} parent=11 // pred_check_branch
          %371 = sbr.rel (%p369) target = $region40
        $region39: #{tpu_custom_call.1} parent=11 // pred_region
          _
        $region40: #{tpu_custom_call.1} parent=11 // pred_fallthru
          _
        // Predicated region
        $region41: #{tpu_custom_call.1} parent=11 // pred_check
          %p372 = pneg %p268
        $region42: #{tpu_custom_call.1} parent=11 // pred_check_branch
          %374 = sbr.rel (%p372) target = $region44
        $region43: #{tpu_custom_call.1} parent=11 // pred_region
          _
        $region44: #{tpu_custom_call.1} parent=11 // pred_fallthru
          _
        // Predicated region
        $region45: #{tpu_custom_call.1} parent=11 // pred_check
          %p375 = pneg %p289
        $region46: #{tpu_custom_call.1} parent=11 // pred_check_branch
          %377 = sbr.rel (%p375) target = $region48
        $region47: #{tpu_custom_call.1} parent=11 // pred_region
          _
        $region48: #{tpu_custom_call.1} parent=11 // pred_fallthru
          _
        // Predicated region
        $region49: #{tpu_custom_call.1} parent=11 // pred_check
          %p378 = pneg %p310
        $region50: #{tpu_custom_call.1} parent=11 // pred_check_branch
          %380 = sbr.rel (%p378) target = $region52
        $region51: #{tpu_custom_call.1} parent=11 // pred_region
          _
        $region52: #{tpu_custom_call.1} parent=11 // pred_fallthru
          _
      $region12: #{tpu_custom_call.1} parent=5 // pred_fallthru
        _
      %p381 = scmp.lt.s32.totalorder %s22, 2
      // Predicated region
      $region53: #{tpu_custom_call.1} parent=5 // pred_check
        %p382 = pneg %p381
      $region54: #{tpu_custom_call.1} parent=5 // pred_check_branch
        %384 = sbr.rel (%p382) target = $region56
      $region55: #{tpu_custom_call.1} parent=5 // pred_region
        // Predicated region
        $region57: #{tpu_custom_call.1} parent=55 // pred_check
          %p385 = pneg %p42
        $region58: #{tpu_custom_call.1} parent=55 // pred_check_branch
          %387 = sbr.rel (%p385) target = $region60
        $region59: #{tpu_custom_call.1} parent=55 // pred_region
          %s388 = smul.u32 16, %s22
          %p389 = scmp.lt.s32.totalorder %s388, 31
          %s390 = scalar_select %p389, %s388, 31
          %s391 = smul.addr %s390, 8
          %s392 = scalar_lea.vmem %s0, %s391
          %s393 = smul.u32 16, %s22
        $region60: #{tpu_custom_call.1} parent=55 // pred_fallthru
          _
        // Predicated region
        $region61: #{tpu_custom_call.1} parent=55 // pred_check
          %p394 = pneg %p68
        $region62: #{tpu_custom_call.1} parent=55 // pred_check_branch
          %396 = sbr.rel (%p394) target = $region64
        $region63: #{tpu_custom_call.1} parent=55 // pred_region
          %s397 = smul.u32 16, %s22
          %p398 = scmp.lt.s32.totalorder %s397, 31
          %s399 = scalar_select %p398, %s397, 31
          %s400 = smul.addr %s399, 8
          %s401 = scalar_lea.vmem %s1, %s400
          %s402 = smul.u32 16, %s22
        $region64: #{tpu_custom_call.1} parent=55 // pred_fallthru
          _
        // Predicated region
        $region65: #{tpu_custom_call.1} parent=55 // pred_check
          %p403 = pneg %p94
        $region66: #{tpu_custom_call.1} parent=55 // pred_check_branch
          %405 = sbr.rel (%p403) target = $region68
        $region67: #{tpu_custom_call.1} parent=55 // pred_region
          %s406 = smul.u32 16, %s22
          %p407 = scmp.lt.s32.totalorder %s406, 31
          %s408 = scalar_select %p407, %s406, 31
          %s409 = smul.addr %s408, 8
          %s410 = scalar_lea.vmem %s2, %s409
          %s411 = smul.u32 16, %s22
        $region68: #{tpu_custom_call.1} parent=55 // pred_fallthru
          _
      $region56: #{tpu_custom_call.1} parent=5 // pred_fallthru
        _
      %p412 = scmp.le.s32.totalorder 1, %s22
      %p413 = scmp.lt.s32.totalorder %s22, 3
      %p414 = pnand %p412, %p413
      %p415 = pneg %p414
      // Predicated region
      $region69: #{tpu_custom_call.1} parent=5 // pred_check
        _
      $region70: #{tpu_custom_call.1} parent=5 // pred_check_branch
        %417 = sbr.rel (%p414) target = $region72
      $region71: #{tpu_custom_call.1} parent=5 // pred_region
        %s418 = ssub.s32 %s22, 1
        %s419 = smul.u32 16, %s27
        %p420 = scmp.lt.s32.totalorder %s419, 31
        %s421 = scalar_select %p420, %s419, 31
        %s422 = smul.addr %s421, 8
        %s423 = scalar_lea.vmem %s0, %s422
        %p424 = pneg %p48
        %p425 = pneg %p45
        %s426 = smul.u32 16, %s27
        %p427 = scmp.lt.s32.totalorder %s426, 31
        %s428 = scalar_select %p427, %s426, 31
        %s429 = smul.addr %s428, 8
        %s430 = scalar_lea.vmem %s1, %s429
        %p431 = pneg %p74
        %p432 = pneg %p71
        %s433 = smul.u32 16, %s27
        %p434 = scmp.lt.s32.totalorder %s433, 31
        %s435 = scalar_select %p434, %s433, 31
        %s436 = smul.addr %s435, 8
        %s437 = scalar_lea.vmem %s2, %s436
        %p438 = pneg %p100
        %p439 = pneg %p97
        %p440 = pneg %p121
        %p441 = pneg %p118
        %p442 = pneg %p142
        %p443 = pneg %p139
        %p444 = pneg %p163
        %p445 = pneg %p160
        %p446 = pneg %p184
        %p447 = pneg %p181
        %p448 = pneg %p205
        %p449 = pneg %p202
        %p450 = pneg %p226
        %p451 = pneg %p223
        %p452 = pneg %p247
        %p453 = pneg %p244
        %p454 = pneg %p268
        %p455 = pneg %p265
        %p456 = pneg %p289
        %p457 = pneg %p286
        %p458 = pneg %p310
        %p459 = pneg %p307
        %p460 = pneg %p336
        %p461 = pneg %p333
        %s462 = sand.u32 %s323, 1
        %s463 = scalar_lea.sflag [#allocation3], %s462
        %s464 = sand.u32 %s323, 1
        %s465 = smul.addr %s464, 128
        %s466 = scalar_lea.vmem [#allocation2], %s465
        %s467 = smul.u32 16, %s27
        %p468 = scmp.lt.s32.totalorder %s467, 31
        %s469 = scalar_select %p468, %s467, 31
        %s470 = smul.addr %s469, 8
        %s471 = scalar_lea.vmem %s0, %s470
        %s472 = smul.u32 16, %s27
        %s473 = smul.u32 16, %s27
        %p474 = scmp.lt.s32.totalorder %s473, 31
        %s475 = scalar_select %p474, %s473, 31
        %s476 = smul.addr %s475, 8
        %s477 = scalar_lea.vmem %s1, %s476
        %s478 = smul.u32 16, %s27
        %s479 = smul.u32 16, %s27
        %p480 = scmp.lt.s32.totalorder %s479, 31
        %s481 = scalar_select %p480, %s479, 31
        %s482 = smul.addr %s481, 8
        %s483 = scalar_lea.vmem %s2, %s482
        %s484 = smul.u32 16, %s27
        %s485 = smul.u32 16, %s27
        %v486 = vlaneseq
        %v487 = vand.u32 %v486, 127
        %vm488 = vcmp.lt.s32.totalorder %v487, 64
        %v489 = vld [vmem:[%s471] sm:$0xff]
        %v490 = vld [vmem:[%s471 + $0x8] sm:$0xff]
        %v491 = vld [vmem:[%s471 + $0x10] sm:$0xff]
        %v492 = vld [vmem:[%s471 + $0x18] sm:$0xff]
        %v493 = vld [vmem:[%s471 + $0x20] sm:$0xff]
        %v494 = vld [vmem:[%s471 + $0x28] sm:$0xff]
        %v495 = vld [vmem:[%s471 + $0x30] sm:$0xff]
        %v496 = vld [vmem:[%s471 + $0x38] sm:$0xff]
        %v497 = vld [vmem:[%s471 + $0x40] sm:$0xff]
        %v498 = vld [vmem:[%s471 + $0x48] sm:$0xff]
        %v499 = vld [vmem:[%s471 + $0x50] sm:$0xff]
        %v500 = vld [vmem:[%s471 + $0x58] sm:$0xff]
        %v501 = vld [vmem:[%s471 + $0x60] sm:$0xff]
        %v502 = vld [vmem:[%s471 + $0x68] sm:$0xff]
        %v503 = vld [vmem:[%s471 + $0x70] sm:$0xff]
        %v504 = vld [vmem:[%s471 + $0x78] sm:$0xff]
        %v505 = vld [vmem:[%s3] sm:$0xff]
        %v506 = vld [vmem:[%s3 + $0x8] sm:$0xff]
        %v507 = vld [vmem:[%s3 + $0x10] sm:$0xff]
        %v508 = vld [vmem:[%s3 + $0x18] sm:$0xff]
        %v509 = vld [vmem:[%s477] sm:$0xff]
        %v510 = vld [vmem:[%s477 + $0x8] sm:$0xff]
        %v511 = vld [vmem:[%s477 + $0x10] sm:$0xff]
        %v512 = vld [vmem:[%s477 + $0x18] sm:$0xff]
        %v513 = vld [vmem:[%s477 + $0x20] sm:$0xff]
        %v514 = vld [vmem:[%s477 + $0x28] sm:$0xff]
        %v515 = vld [vmem:[%s477 + $0x30] sm:$0xff]
        %v516 = vld [vmem:[%s477 + $0x38] sm:$0xff]
        %v517 = vld [vmem:[%s477 + $0x40] sm:$0xff]
        %v518 = vld [vmem:[%s477 + $0x48] sm:$0xff]
        %v519 = vld [vmem:[%s477 + $0x50] sm:$0xff]
        %v520 = vld [vmem:[%s477 + $0x58] sm:$0xff]
        %v521 = vld [vmem:[%s477 + $0x60] sm:$0xff]
        %v522 = vld [vmem:[%s477 + $0x68] sm:$0xff]
        %v523 = vld [vmem:[%s477 + $0x70] sm:$0xff]
        %v524 = vld [vmem:[%s477 + $0x78] sm:$0xff]
        %v525 = vld [vmem:[%s4] sm:$0xff]
        %v526 = vld [vmem:[%s4 + $0x8] sm:$0xff]
        %v527 = vld [vmem:[%s4 + $0x10] sm:$0xff]
        %v528 = vld [vmem:[%s4 + $0x18] sm:$0xff]
        %vm529 = vcmask 261120
        %v531 = vsel %vm529, %v509, 0
        %v534 = vsel %vm529, %v510, 0
        %v537 = vsel %vm529, %v511, 0
        %v540 = vsel %vm529, %v512, 0
        %v543 = vsel %vm529, %v513, 0
        %v546 = vsel %vm529, %v514, 0
        %v549 = vsel %vm529, %v515, 0
        %v552 = vsel %vm529, %v516, 0
        %v555 = vsel %vm529, %v517, 0
        %v558 = vsel %vm529, %v518, 0
        %v561 = vsel %vm529, %v519, 0
        %v564 = vsel %vm529, %v520, 0
        %v567 = vsel %vm529, %v521, 0
        %v570 = vsel %vm529, %v522, 0
        %v573 = vsel %vm529, %v523, 0
        %v576 = vsel %vm529, %v524, 0
        %578 = vmatprep.subr.mxu0 0.0
        %579 = vmatpush1.msra.mxu0 0.0
        %580 = vmatprep.subr.mxu0 0.0
        %581 = vmatpush1.msra.mxu0 0.0
        %582 = vmatprep.subr.mxu0 0.0
        %583 = vmatpush1.msra.mxu0 0.0
        %584 = vmatprep.subr.mxu0 0.0
        %585 = vmatpush1.msra.mxu0 0.0
        %586 = vmatprep.subr.mxu0 0.0
        %587 = vmatpush1.msra.mxu0 0.0
        %588 = vmatprep.subr.mxu0 0.0
        %589 = vmatpush1.msra.mxu0 0.0
        %590 = vmatprep.subr.mxu0 0.0
        %591 = vmatpush1.msra.mxu0 0.0
        %592 = vmatprep.subr.mxu0 0.0
        %593 = vmatpush1.msra.mxu0 0.0
        %594 = vmatprep.subr.mxu0 0.0
        %595 = vmatpush1.msra.mxu0 0.0
        %596 = vmatprep.subr.mxu0 0.0
        %597 = vmatpush1.msra.mxu0 0.0
        %598 = vmatprep.subr.mxu0 0.0
        %599 = vmatpush1.msra.mxu0 0.0
        %600 = vmatprep.subr.mxu0 0.0
        %601 = vmatpush1.msra.mxu0 0.0
        %602 = vmatprep.subr.mxu0 0.0
        %603 = vmatpush1.msra.mxu0 %v528
        %604 = vmatprep.subr.mxu0 0.0
        %605 = vmatpush1.msra.mxu0 %v527
        %606 = vmatprep.subr.mxu0 0.0
        %607 = vmatpush1.msra.mxu0 %v526
        %608 = vmatprep.subr.mxu0 0.0
        %609 = vmatpush1.msra.mxu0 %v525
        %610 = vmatprep.subr.mxu0 0.0
        %611 = vmatpush2.msra.mxu0 0.0
        %612 = vmatprep.subr.mxu0 0.0
        %613 = vmatpush2.msra.mxu0 0.0
        %614 = vmatprep.subr.mxu0 0.0
        %615 = vmatpush2.msra.mxu0 0.0
        %616 = vmatprep.subr.mxu0 0.0
        %617 = vmatpush2.msra.mxu0 0.0
        %618 = vmatprep.subr.mxu0 0.0
        %619 = vmatpush2.msra.mxu0 0.0
        %620 = vmatprep.subr.mxu0 0.0
        %621 = vmatpush2.msra.mxu0 0.0
        %622 = vmatprep.subr.mxu0 0.0
        %623 = vmatpush2.msra.mxu0 0.0
        %624 = vmatprep.subr.mxu0 0.0
        %625 = vmatpush2.msra.mxu0 0.0
        %626 = vmatprep.subr.mxu0 0.0
        %627 = vmatpush2.msra.mxu0 0.0
        %628 = vmatprep.subr.mxu0 0.0
        %629 = vmatpush2.msra.mxu0 0.0
        %630 = vmatprep.subr.mxu0 0.0
        %631 = vmatpush2.msra.mxu0 0.0
        %632 = vmatprep.subr.mxu0 0.0
        %633 = vmatpush2.msra.mxu0 0.0
        %634 = vmatprep.subr.mxu0 0.0
        %635 = vmatpush2.msra.mxu0 0.0
        %636 = vmatprep.subr.mxu0 0.0
        %637 = vmatpush2.msra.mxu0 0.0
        %638 = vmatprep.subr.mxu0 0.0
        %639 = vmatpush2.msra.mxu0 0.0
        %640 = vmatprep.subr.mxu0 0.0
        %641 = vmatpush2.msra.mxu0 0.0
        %642 = vmatprep.mubr.f32.mxu0 0.0
        %643 = vmatmul.mubr.f32.gmra.mxu0 %v531
        %v644 = vpop.f32.mrf.mxu0
        %v645 = vadd.f32 0.0, %v644
        %v646 = vpop.f32.mrf.mxu0
        %647 = vmatprep.mubr.f32.mxu0 0.0
        %648 = vmatmul.mubr.f32.gmra.mxu0 %v534
        %v649 = vpop.f32.mrf.mxu0
        %v650 = vadd.f32 0.0, %v649
        %v651 = vpop.f32.mrf.mxu0
        %652 = vmatprep.mubr.f32.mxu0 0.0
        %653 = vmatmul.mubr.f32.gmra.mxu0 %v537
        %v654 = vpop.f32.mrf.mxu0
        %v655 = vadd.f32 0.0, %v654
        %v656 = vpop.f32.mrf.mxu0
        %657 = vmatprep.mubr.f32.mxu0 0.0
        %658 = vmatmul.mubr.f32.gmra.mxu0 %v540
        %v659 = vpop.f32.mrf.mxu0
        %v660 = vadd.f32 0.0, %v659
        %v661 = vpop.f32.mrf.mxu0
        %662 = vmatprep.mubr.f32.mxu0 0.0
        %663 = vmatmul.mubr.f32.gmra.mxu0 %v543
        %v664 = vpop.f32.mrf.mxu0
        %v665 = vadd.f32 0.0, %v664
        %v666 = vpop.f32.mrf.mxu0
        %667 = vmatprep.mubr.f32.mxu0 0.0
        %668 = vmatmul.mubr.f32.gmra.mxu0 %v546
        %v669 = vpop.f32.mrf.mxu0
        %v670 = vadd.f32 0.0, %v669
        %v671 = vpop.f32.mrf.mxu0
        %672 = vmatprep.mubr.f32.mxu0 0.0
        %673 = vmatmul.mubr.f32.gmra.mxu0 %v549
        %v674 = vpop.f32.mrf.mxu0
        %v675 = vadd.f32 0.0, %v674
        %v676 = vpop.f32.mrf.mxu0
        %677 = vmatprep.mubr.f32.mxu0 0.0
        %678 = vmatmul.mubr.f32.gmra.mxu0 %v552
        %v679 = vpop.f32.mrf.mxu0
        %v680 = vadd.f32 0.0, %v679
        %v681 = vpop.f32.mrf.mxu0
        %682 = vmatprep.mubr.f32.mxu0 0.0
        %683 = vmatmul.mubr.f32.gmra.mxu0 %v555
        %v684 = vpop.f32.mrf.mxu0
        %v685 = vadd.f32 0.0, %v684
        %v686 = vpop.f32.mrf.mxu0
        %687 = vmatprep.mubr.f32.mxu0 0.0
        %688 = vmatmul.mubr.f32.gmra.mxu0 %v558
        %v689 = vpop.f32.mrf.mxu0
        %v690 = vadd.f32 0.0, %v689
        %v691 = vpop.f32.mrf.mxu0
        %692 = vmatprep.mubr.f32.mxu0 0.0
        %693 = vmatmul.mubr.f32.gmra.mxu0 %v561
        %v694 = vpop.f32.mrf.mxu0
        %v695 = vadd.f32 0.0, %v694
        %v696 = vpop.f32.mrf.mxu0
        %697 = vmatprep.mubr.f32.mxu0 0.0
        %698 = vmatmul.mubr.f32.gmra.mxu0 %v564
        %v699 = vpop.f32.mrf.mxu0
        %v700 = vadd.f32 0.0, %v699
        %v701 = vpop.f32.mrf.mxu0
        %702 = vmatprep.mubr.f32.mxu0 0.0
        %703 = vmatmul.mubr.f32.gmra.mxu0 %v567
        %v704 = vpop.f32.mrf.mxu0
        %v705 = vadd.f32 0.0, %v704
        %v706 = vpop.f32.mrf.mxu0
        %707 = vmatprep.mubr.f32.mxu0 0.0
        %708 = vmatmul.mubr.f32.gmra.mxu0 %v570
        %v709 = vpop.f32.mrf.mxu0
        %v710 = vadd.f32 0.0, %v709
        %v711 = vpop.f32.mrf.mxu0
        %712 = vmatprep.mubr.f32.mxu0 0.0
        %713 = vmatmul.mubr.f32.gmra.mxu0 %v573
        %v714 = vpop.f32.mrf.mxu0
        %v715 = vadd.f32 0.0, %v714
        %v716 = vpop.f32.mrf.mxu0
        %717 = vmatprep.mubr.f32.mxu0 0.0
        %718 = vmatmul.mubr.f32.gmra.mxu0 %v576
        %v719 = vpop.f32.mrf.mxu0
        %v720 = vadd.f32 0.0, %v719
        %v721 = vpop.f32.mrf.mxu0
        %722 = vdwg.mxu0
        %v724 = vsel %vm529, %v489, 0
        %v727 = vsel %vm529, %v490, 0
        %v730 = vsel %vm529, %v491, 0
        %v733 = vsel %vm529, %v492, 0
        %v736 = vsel %vm529, %v493, 0
        %v739 = vsel %vm529, %v494, 0
        %v742 = vsel %vm529, %v495, 0
        %v745 = vsel %vm529, %v496, 0
        %v748 = vsel %vm529, %v497, 0
        %v751 = vsel %vm529, %v498, 0
        %v754 = vsel %vm529, %v499, 0
        %v757 = vsel %vm529, %v500, 0
        %v760 = vsel %vm529, %v501, 0
        %v763 = vsel %vm529, %v502, 0
        %v766 = vsel %vm529, %v503, 0
        %v769 = vsel %vm529, %v504, 0
        %771 = vmatprep.subr.mxu0 0.0
        %772 = vmatpush1.msra.mxu0 0.0
        %773 = vmatprep.subr.mxu0 0.0
        %774 = vmatpush1.msra.mxu0 0.0
        %775 = vmatprep.subr.mxu0 0.0
        %776 = vmatpush1.msra.mxu0 0.0
        %777 = vmatprep.subr.mxu0 0.0
        %778 = vmatpush1.msra.mxu0 0.0
        %779 = vmatprep.subr.mxu0 0.0
        %780 = vmatpush1.msra.mxu0 0.0
        %781 = vmatprep.subr.mxu0 0.0
        %782 = vmatpush1.msra.mxu0 0.0
        %783 = vmatprep.subr.mxu0 0.0
        %784 = vmatpush1.msra.mxu0 0.0
        %785 = vmatprep.subr.mxu0 0.0
        %786 = vmatpush1.msra.mxu0 0.0
        %787 = vmatprep.subr.mxu0 0.0
        %788 = vmatpush1.msra.mxu0 0.0
        %789 = vmatprep.subr.mxu0 0.0
        %790 = vmatpush1.msra.mxu0 0.0
        %791 = vmatprep.subr.mxu0 0.0
        %792 = vmatpush1.msra.mxu0 0.0
        %793 = vmatprep.subr.mxu0 0.0
        %794 = vmatpush1.msra.mxu0 0.0
        %795 = vmatprep.subr.mxu0 0.0
        %796 = vmatpush1.msra.mxu0 %v508
        %797 = vmatprep.subr.mxu0 0.0
        %798 = vmatpush1.msra.mxu0 %v507
        %799 = vmatprep.subr.mxu0 0.0
        %800 = vmatpush1.msra.mxu0 %v506
        %801 = vmatprep.subr.mxu0 0.0
        %802 = vmatpush1.msra.mxu0 %v505
        %803 = vmatprep.subr.mxu0 0.0
        %804 = vmatpush2.msra.mxu0 0.0
        %805 = vmatprep.subr.mxu0 0.0
        %806 = vmatpush2.msra.mxu0 0.0
        %807 = vmatprep.subr.mxu0 0.0
        %808 = vmatpush2.msra.mxu0 0.0
        %809 = vmatprep.subr.mxu0 0.0
        %810 = vmatpush2.msra.mxu0 0.0
        %811 = vmatprep.subr.mxu0 0.0
        %812 = vmatpush2.msra.mxu0 0.0
        %813 = vmatprep.subr.mxu0 0.0
        %814 = vmatpush2.msra.mxu0 0.0
        %815 = vmatprep.subr.mxu0 0.0
        %816 = vmatpush2.msra.mxu0 0.0
        %817 = vmatprep.subr.mxu0 0.0
        %818 = vmatpush2.msra.mxu0 0.0
        %819 = vmatprep.subr.mxu0 0.0
        %820 = vmatpush2.msra.mxu0 0.0
        %821 = vmatprep.subr.mxu0 0.0
        %822 = vmatpush2.msra.mxu0 0.0
        %823 = vmatprep.subr.mxu0 0.0
        %824 = vmatpush2.msra.mxu0 0.0
        %825 = vmatprep.subr.mxu0 0.0
        %826 = vmatpush2.msra.mxu0 0.0
        %827 = vmatprep.subr.mxu0 0.0
        %828 = vmatpush2.msra.mxu0 0.0
        %829 = vmatprep.subr.mxu0 0.0
        %830 = vmatpush2.msra.mxu0 0.0
        %831 = vmatprep.subr.mxu0 0.0
        %832 = vmatpush2.msra.mxu0 0.0
        %833 = vmatprep.subr.mxu0 0.0
        %834 = vmatpush2.msra.mxu0 0.0
        %835 = vmatprep.mubr.f32.mxu0 0.0
        %836 = vmatmul.mubr.f32.gmra.mxu0 %v724
        %v837 = vpop.f32.mrf.mxu0
        %v838 = vadd.f32 %v645, %v837
        %v839 = vpop.f32.mrf.mxu0
        %840 = vmatprep.mubr.f32.mxu0 0.0
        %841 = vmatmul.mubr.f32.gmra.mxu0 %v727
        %v842 = vpop.f32.mrf.mxu0
        %v843 = vadd.f32 %v650, %v842
        %v844 = vpop.f32.mrf.mxu0
        %845 = vmatprep.mubr.f32.mxu0 0.0
        %846 = vmatmul.mubr.f32.gmra.mxu0 %v730
        %v847 = vpop.f32.mrf.mxu0
        %v848 = vadd.f32 %v655, %v847
        %v849 = vpop.f32.mrf.mxu0
        %850 = vmatprep.mubr.f32.mxu0 0.0
        %851 = vmatmul.mubr.f32.gmra.mxu0 %v733
        %v852 = vpop.f32.mrf.mxu0
        %v853 = vadd.f32 %v660, %v852
        %v854 = vpop.f32.mrf.mxu0
        %855 = vmatprep.mubr.f32.mxu0 0.0
        %856 = vmatmul.mubr.f32.gmra.mxu0 %v736
        %v857 = vpop.f32.mrf.mxu0
        %v858 = vadd.f32 %v665, %v857
        %v859 = vpop.f32.mrf.mxu0
        %860 = vmatprep.mubr.f32.mxu0 0.0
        %861 = vmatmul.mubr.f32.gmra.mxu0 %v739
        %v862 = vpop.f32.mrf.mxu0
        %v863 = vadd.f32 %v670, %v862
        %v864 = vpop.f32.mrf.mxu0
        %865 = vmatprep.mubr.f32.mxu0 0.0
        %866 = vmatmul.mubr.f32.gmra.mxu0 %v742
        %v867 = vpop.f32.mrf.mxu0
        %v868 = vadd.f32 %v675, %v867
        %v869 = vpop.f32.mrf.mxu0
        %870 = vmatprep.mubr.f32.mxu0 0.0
        %871 = vmatmul.mubr.f32.gmra.mxu0 %v745
        %v872 = vpop.f32.mrf.mxu0
        %v873 = vadd.f32 %v680, %v872
        %v874 = vpop.f32.mrf.mxu0
        %875 = vmatprep.mubr.f32.mxu0 0.0
        %876 = vmatmul.mubr.f32.gmra.mxu0 %v748
        %v877 = vpop.f32.mrf.mxu0
        %v878 = vadd.f32 %v685, %v877
        %v879 = vpop.f32.mrf.mxu0
        %880 = vmatprep.mubr.f32.mxu0 0.0
        %881 = vmatmul.mubr.f32.gmra.mxu0 %v751
        %v882 = vpop.f32.mrf.mxu0
        %v883 = vadd.f32 %v690, %v882
        %v884 = vpop.f32.mrf.mxu0
        %885 = vmatprep.mubr.f32.mxu0 0.0
        %886 = vmatmul.mubr.f32.gmra.mxu0 %v754
        %v887 = vpop.f32.mrf.mxu0
        %v888 = vadd.f32 %v695, %v887
        %v889 = vpop.f32.mrf.mxu0
        %890 = vmatprep.mubr.f32.mxu0 0.0
        %891 = vmatmul.mubr.f32.gmra.mxu0 %v757
        %v892 = vpop.f32.mrf.mxu0
        %v893 = vadd.f32 %v700, %v892
        %v894 = vpop.f32.mrf.mxu0
        %895 = vmatprep.mubr.f32.mxu0 0.0
        %896 = vmatmul.mubr.f32.gmra.mxu0 %v760
        %v897 = vpop.f32.mrf.mxu0
        %v898 = vadd.f32 %v705, %v897
        %v899 = vpop.f32.mrf.mxu0
        %900 = vmatprep.mubr.f32.mxu0 0.0
        %901 = vmatmul.mubr.f32.gmra.mxu0 %v763
        %v902 = vpop.f32.mrf.mxu0
        %v903 = vadd.f32 %v710, %v902
        %v904 = vpop.f32.mrf.mxu0
        %905 = vmatprep.mubr.f32.mxu0 0.0
        %906 = vmatmul.mubr.f32.gmra.mxu0 %v766
        %v907 = vpop.f32.mrf.mxu0
        %v908 = vadd.f32 %v715, %v907
        %v909 = vpop.f32.mrf.mxu0
        %910 = vmatprep.mubr.f32.mxu0 0.0
        %911 = vmatmul.mubr.f32.gmra.mxu0 %v769
        %v912 = vpop.f32.mrf.mxu0
        %v913 = vadd.f32 %v720, %v912
        %v914 = vpop.f32.mrf.mxu0
        %915 = vdwg.mxu0
        %v916 = vld [vmem:[%s483] sm:$0xff]
        %v917 = vld [vmem:[%s483 + $0x8] sm:$0xff]
        %v918 = vld [vmem:[%s483 + $0x10] sm:$0xff]
        %v919 = vld [vmem:[%s483 + $0x18] sm:$0xff]
        %v920 = vld [vmem:[%s483 + $0x20] sm:$0xff]
        %v921 = vld [vmem:[%s483 + $0x28] sm:$0xff]
        %v922 = vld [vmem:[%s483 + $0x30] sm:$0xff]
        %v923 = vld [vmem:[%s483 + $0x38] sm:$0xff]
        %v924 = vld [vmem:[%s483 + $0x40] sm:$0xff]
        %v925 = vld [vmem:[%s483 + $0x48] sm:$0xff]
        %v926 = vld [vmem:[%s483 + $0x50] sm:$0xff]
        %v927 = vld [vmem:[%s483 + $0x58] sm:$0xff]
        %v928 = vld [vmem:[%s483 + $0x60] sm:$0xff]
        %v929 = vld [vmem:[%s483 + $0x68] sm:$0xff]
        %v930 = vld [vmem:[%s483 + $0x70] sm:$0xff]
        %v931 = vld [vmem:[%s483 + $0x78] sm:$0xff]
        %v932 = vld [vmem:[%s5] sm:$0xff]
        %v933 = vld [vmem:[%s5 + $0x8] sm:$0xff]
        %v934 = vld [vmem:[%s5 + $0x10] sm:$0xff]
        %v935 = vld [vmem:[%s5 + $0x18] sm:$0xff]
        %v937 = vsel %vm529, %v916, 0
        %v940 = vsel %vm529, %v917, 0
        %v943 = vsel %vm529, %v918, 0
        %v946 = vsel %vm529, %v919, 0
        %v949 = vsel %vm529, %v920, 0
        %v952 = vsel %vm529, %v921, 0
        %v955 = vsel %vm529, %v922, 0
        %v958 = vsel %vm529, %v923, 0
        %v961 = vsel %vm529, %v924, 0
        %v964 = vsel %vm529, %v925, 0
        %v967 = vsel %vm529, %v926, 0
        %v970 = vsel %vm529, %v927, 0
        %v973 = vsel %vm529, %v928, 0
        %v976 = vsel %vm529, %v929, 0
        %v979 = vsel %vm529, %v930, 0
        %v982 = vsel %vm529, %v931, 0
        %984 = vmatprep.subr.mxu0 0.0
        %985 = vmatpush1.msra.mxu0 0.0
        %986 = vmatprep.subr.mxu0 0.0
        %987 = vmatpush1.msra.mxu0 0.0
        %988 = vmatprep.subr.mxu0 0.0
        %989 = vmatpush1.msra.mxu0 0.0
        %990 = vmatprep.subr.mxu0 0.0
        %991 = vmatpush1.msra.mxu0 0.0
        %992 = vmatprep.subr.mxu0 0.0
        %993 = vmatpush1.msra.mxu0 0.0
        %994 = vmatprep.subr.mxu0 0.0
        %995 = vmatpush1.msra.mxu0 0.0
        %996 = vmatprep.subr.mxu0 0.0
        %997 = vmatpush1.msra.mxu0 0.0
        %998 = vmatprep.subr.mxu0 0.0
        %999 = vmatpush1.msra.mxu0 0.0
        %1000 = vmatprep.subr.mxu0 0.0
        %1001 = vmatpush1.msra.mxu0 0.0
        %1002 = vmatprep.subr.mxu0 0.0
        %1003 = vmatpush1.msra.mxu0 0.0
        %1004 = vmatprep.subr.mxu0 0.0
        %1005 = vmatpush1.msra.mxu0 0.0
        %1006 = vmatprep.subr.mxu0 0.0
        %1007 = vmatpush1.msra.mxu0 0.0
        %1008 = vmatprep.subr.mxu0 0.0
        %1009 = vmatpush1.msra.mxu0 %v935
        %1010 = vmatprep.subr.mxu0 0.0
        %1011 = vmatpush1.msra.mxu0 %v934
        %1012 = vmatprep.subr.mxu0 0.0
        %1013 = vmatpush1.msra.mxu0 %v933
        %1014 = vmatprep.subr.mxu0 0.0
        %1015 = vmatpush1.msra.mxu0 %v932
        %1016 = vmatprep.subr.mxu0 0.0
        %1017 = vmatpush2.msra.mxu0 0.0
        %1018 = vmatprep.subr.mxu0 0.0
        %1019 = vmatpush2.msra.mxu0 0.0
        %1020 = vmatprep.subr.mxu0 0.0
        %1021 = vmatpush2.msra.mxu0 0.0
        %1022 = vmatprep.subr.mxu0 0.0
        %1023 = vmatpush2.msra.mxu0 0.0
        %1024 = vmatprep.subr.mxu0 0.0
        %1025 = vmatpush2.msra.mxu0 0.0
        %1026 = vmatprep.subr.mxu0 0.0
        %1027 = vmatpush2.msra.mxu0 0.0
        %1028 = vmatprep.subr.mxu0 0.0
        %1029 = vmatpush2.msra.mxu0 0.0
        %1030 = vmatprep.subr.mxu0 0.0
        %1031 = vmatpush2.msra.mxu0 0.0
        %1032 = vmatprep.subr.mxu0 0.0
        %1033 = vmatpush2.msra.mxu0 0.0
        %1034 = vmatprep.subr.mxu0 0.0
        %1035 = vmatpush2.msra.mxu0 0.0
        %1036 = vmatprep.subr.mxu0 0.0
        %1037 = vmatpush2.msra.mxu0 0.0
        %1038 = vmatprep.subr.mxu0 0.0
        %1039 = vmatpush2.msra.mxu0 0.0
        %1040 = vmatprep.subr.mxu0 0.0
        %1041 = vmatpush2.msra.mxu0 0.0
        %1042 = vmatprep.subr.mxu0 0.0
        %1043 = vmatpush2.msra.mxu0 0.0
        %1044 = vmatprep.subr.mxu0 0.0
        %1045 = vmatpush2.msra.mxu0 0.0
        %1046 = vmatprep.subr.mxu0 0.0
        %1047 = vmatpush2.msra.mxu0 0.0
        %1048 = vmatprep.mubr.f32.mxu0 0.0
        %1049 = vmatmul.mubr.f32.gmra.mxu0 %v937
        %v1050 = vpop.f32.mrf.mxu0
        %v1051 = vadd.f32 0.0, %v1050
        %v1052 = vpop.f32.mrf.mxu0
        %1053 = vmatprep.mubr.f32.mxu0 0.0
        %1054 = vmatmul.mubr.f32.gmra.mxu0 %v940
        %v1055 = vpop.f32.mrf.mxu0
        %v1056 = vadd.f32 0.0, %v1055
        %v1057 = vpop.f32.mrf.mxu0
        %1058 = vmatprep.mubr.f32.mxu0 0.0
        %1059 = vmatmul.mubr.f32.gmra.mxu0 %v943
        %v1060 = vpop.f32.mrf.mxu0
        %v1061 = vadd.f32 0.0, %v1060
        %v1062 = vpop.f32.mrf.mxu0
        %1063 = vmatprep.mubr.f32.mxu0 0.0
        %1064 = vmatmul.mubr.f32.gmra.mxu0 %v946
        %v1065 = vpop.f32.mrf.mxu0
        %v1066 = vadd.f32 0.0, %v1065
        %v1067 = vpop.f32.mrf.mxu0
        %1068 = vmatprep.mubr.f32.mxu0 0.0
        %1069 = vmatmul.mubr.f32.gmra.mxu0 %v949
        %v1070 = vpop.f32.mrf.mxu0
        %v1071 = vadd.f32 0.0, %v1070
        %v1072 = vpop.f32.mrf.mxu0
        %1073 = vmatprep.mubr.f32.mxu0 0.0
        %1074 = vmatmul.mubr.f32.gmra.mxu0 %v952
        %v1075 = vpop.f32.mrf.mxu0
        %v1076 = vadd.f32 0.0, %v1075
        %v1077 = vpop.f32.mrf.mxu0
        %1078 = vmatprep.mubr.f32.mxu0 0.0
        %1079 = vmatmul.mubr.f32.gmra.mxu0 %v955
        %v1080 = vpop.f32.mrf.mxu0
        %v1081 = vadd.f32 0.0, %v1080
        %v1082 = vpop.f32.mrf.mxu0
        %1083 = vmatprep.mubr.f32.mxu0 0.0
        %1084 = vmatmul.mubr.f32.gmra.mxu0 %v958
        %v1085 = vpop.f32.mrf.mxu0
        %v1086 = vadd.f32 0.0, %v1085
        %v1087 = vpop.f32.mrf.mxu0
        %1088 = vmatprep.mubr.f32.mxu0 0.0
        %1089 = vmatmul.mubr.f32.gmra.mxu0 %v961
        %v1090 = vpop.f32.mrf.mxu0
        %v1091 = vadd.f32 0.0, %v1090
        %v1092 = vpop.f32.mrf.mxu0
        %1093 = vmatprep.mubr.f32.mxu0 0.0
        %1094 = vmatmul.mubr.f32.gmra.mxu0 %v964
        %v1095 = vpop.f32.mrf.mxu0
        %v1096 = vadd.f32 0.0, %v1095
        %v1097 = vpop.f32.mrf.mxu0
        %1098 = vmatprep.mubr.f32.mxu0 0.0
        %1099 = vmatmul.mubr.f32.gmra.mxu0 %v967
        %v1100 = vpop.f32.mrf.mxu0
        %v1101 = vadd.f32 0.0, %v1100
        %v1102 = vpop.f32.mrf.mxu0
        %1103 = vmatprep.mubr.f32.mxu0 0.0
        %1104 = vmatmul.mubr.f32.gmra.mxu0 %v970
        %v1105 = vpop.f32.mrf.mxu0
        %v1106 = vadd.f32 0.0, %v1105
        %v1107 = vpop.f32.mrf.mxu0
        %1108 = vmatprep.mubr.f32.mxu0 0.0
        %1109 = vmatmul.mubr.f32.gmra.mxu0 %v973
        %v1110 = vpop.f32.mrf.mxu0
        %v1111 = vadd.f32 0.0, %v1110
        %v1112 = vpop.f32.mrf.mxu0
        %1113 = vmatprep.mubr.f32.mxu0 0.0
        %1114 = vmatmul.mubr.f32.gmra.mxu0 %v976
        %v1115 = vpop.f32.mrf.mxu0
        %v1116 = vadd.f32 0.0, %v1115
        %v1117 = vpop.f32.mrf.mxu0
        %1118 = vmatprep.mubr.f32.mxu0 0.0
        %1119 = vmatmul.mubr.f32.gmra.mxu0 %v979
        %v1120 = vpop.f32.mrf.mxu0
        %v1121 = vadd.f32 0.0, %v1120
        %v1122 = vpop.f32.mrf.mxu0
        %1123 = vmatprep.mubr.f32.mxu0 0.0
        %1124 = vmatmul.mubr.f32.gmra.mxu0 %v982
        %v1125 = vpop.f32.mrf.mxu0
        %v1126 = vadd.f32 0.0, %v1125
        %v1127 = vpop.f32.mrf.mxu0
        %1128 = vdwg.mxu0
        %v1129 = vadd.f32 %v838, %v1051
        %v1130 = vadd.f32 %v843, %v1056
        %v1131 = vadd.f32 %v848, %v1061
        %v1132 = vadd.f32 %v853, %v1066
        %v1133 = vadd.f32 %v858, %v1071
        %v1134 = vadd.f32 %v863, %v1076
        %v1135 = vadd.f32 %v868, %v1081
        %v1136 = vadd.f32 %v873, %v1086
        %v1137 = vadd.f32 %v878, %v1091
        %v1138 = vadd.f32 %v883, %v1096
        %v1139 = vadd.f32 %v888, %v1101
        %v1140 = vadd.f32 %v893, %v1106
        %v1141 = vadd.f32 %v898, %v1111
        %v1142 = vadd.f32 %v903, %v1116
        %v1143 = vadd.f32 %v908, %v1121
        %v1144 = vadd.f32 %v913, %v1126
        %v1145 = vld [vmem:[%s6] sm:$0x1]
        %v1146 = vld [vmem:[%s7] sm:$0x1]
        %1147 = vadd.xlane.f32.xlu0 %v1129
        %v1148 = vpop.xlane.xlu0 %1147
        %1149 = vadd.xlane.f32.xlu0 %v1130
        %v1150 = vpop.xlane.xlu0 %1149
        %1151 = vadd.xlane.f32.xlu0 %v1131
        %v1152 = vpop.xlane.xlu0 %1151
        %1153 = vadd.xlane.f32.xlu0 %v1132
        %v1154 = vpop.xlane.xlu0 %1153
        %1155 = vadd.xlane.f32.xlu0 %v1133
        %v1156 = vpop.xlane.xlu0 %1155
        %1157 = vadd.xlane.f32.xlu0 %v1134
        %v1158 = vpop.xlane.xlu0 %1157
        %1159 = vadd.xlane.f32.xlu0 %v1135
        %v1160 = vpop.xlane.xlu0 %1159
        %1161 = vadd.xlane.f32.xlu0 %v1136
        %v1162 = vpop.xlane.xlu0 %1161
        %1163 = vadd.xlane.f32.xlu0 %v1137
        %v1164 = vpop.xlane.xlu0 %1163
        %1165 = vadd.xlane.f32.xlu0 %v1138
        %v1166 = vpop.xlane.xlu0 %1165
        %1167 = vadd.xlane.f32.xlu0 %v1139
        %v1168 = vpop.xlane.xlu0 %1167
        %1169 = vadd.xlane.f32.xlu0 %v1140
        %v1170 = vpop.xlane.xlu0 %1169
        %1171 = vadd.xlane.f32.xlu0 %v1141
        %v1172 = vpop.xlane.xlu0 %1171
        %1173 = vadd.xlane.f32.xlu0 %v1142
        %v1174 = vpop.xlane.xlu0 %1173
        %1175 = vadd.xlane.f32.xlu0 %v1143
        %v1176 = vpop.xlane.xlu0 %1175
        %1177 = vadd.xlane.f32.xlu0 %v1144
        %v1178 = vpop.xlane.xlu0 %1177
        %v1179 = vmul.f32 %v1148, 0.015625
        %v1180 = vmul.f32 %v1150, 0.015625
        %v1181 = vmul.f32 %v1152, 0.015625
        %v1182 = vmul.f32 %v1154, 0.015625
        %v1183 = vmul.f32 %v1156, 0.015625
        %v1184 = vmul.f32 %v1158, 0.015625
        %v1185 = vmul.f32 %v1160, 0.015625
        %v1186 = vmul.f32 %v1162, 0.015625
        %v1187 = vmul.f32 %v1164, 0.015625
        %v1188 = vmul.f32 %v1166, 0.015625
        %v1189 = vmul.f32 %v1168, 0.015625
        %v1190 = vmul.f32 %v1170, 0.015625
        %v1191 = vmul.f32 %v1172, 0.015625
        %v1192 = vmul.f32 %v1174, 0.015625
        %v1193 = vmul.f32 %v1176, 0.015625
        %v1194 = vmul.f32 %v1178, 0.015625
        %v1195 = vsub.f32 %v1129, %v1179
        %v1196 = vsub.f32 %v1130, %v1180
        %v1197 = vsub.f32 %v1131, %v1181
        %v1198 = vsub.f32 %v1132, %v1182
        %v1199 = vsub.f32 %v1133, %v1183
        %v1200 = vsub.f32 %v1134, %v1184
        %v1201 = vsub.f32 %v1135, %v1185
        %v1202 = vsub.f32 %v1136, %v1186
        %v1203 = vsub.f32 %v1137, %v1187
        %v1204 = vsub.f32 %v1138, %v1188
        %v1205 = vsub.f32 %v1139, %v1189
        %v1206 = vsub.f32 %v1140, %v1190
        %v1207 = vsub.f32 %v1141, %v1191
        %v1208 = vsub.f32 %v1142, %v1192
        %v1209 = vsub.f32 %v1143, %v1193
        %v1210 = vsub.f32 %v1144, %v1194
        %v1211 = vsel %vm488, 1, 0
        %vm1212 = vcmp.eq.s32.totalorder %v1211, 1
        %v1213 = vsel %vm1212, %v1195, 0.0
        %v1214 = vsel %vm1212, %v1196, 0.0
        %v1215 = vsel %vm1212, %v1197, 0.0
        %v1216 = vsel %vm1212, %v1198, 0.0
        %v1217 = vsel %vm1212, %v1199, 0.0
        %v1218 = vsel %vm1212, %v1200, 0.0
        %v1219 = vsel %vm1212, %v1201, 0.0
        %v1220 = vsel %vm1212, %v1202, 0.0
        %v1221 = vsel %vm1212, %v1203, 0.0
        %v1222 = vsel %vm1212, %v1204, 0.0
        %v1223 = vsel %vm1212, %v1205, 0.0
        %v1224 = vsel %vm1212, %v1206, 0.0
        %v1225 = vsel %vm1212, %v1207, 0.0
        %v1226 = vsel %vm1212, %v1208, 0.0
        %v1227 = vsel %vm1212, %v1209, 0.0
        %v1228 = vsel %vm1212, %v1210, 0.0
        %v1229 = vmul.f32 %v1213, %v1213
        %v1230 = vmul.f32 %v1214, %v1214
        %v1231 = vmul.f32 %v1215, %v1215
        %v1232 = vmul.f32 %v1216, %v1216
        %v1233 = vmul.f32 %v1217, %v1217
        %v1234 = vmul.f32 %v1218, %v1218
        %v1235 = vmul.f32 %v1219, %v1219
        %v1236 = vmul.f32 %v1220, %v1220
        %v1237 = vmul.f32 %v1221, %v1221
        %v1238 = vmul.f32 %v1222, %v1222
        %v1239 = vmul.f32 %v1223, %v1223
        %v1240 = vmul.f32 %v1224, %v1224
        %v1241 = vmul.f32 %v1225, %v1225
        %v1242 = vmul.f32 %v1226, %v1226
        %v1243 = vmul.f32 %v1227, %v1227
        %v1244 = vmul.f32 %v1228, %v1228
        %1245 = vadd.xlane.f32.xlu0 %v1229
        %v1246 = vpop.xlane.xlu0 %1245
        %1247 = vadd.xlane.f32.xlu0 %v1230
        %v1248 = vpop.xlane.xlu0 %1247
        %1249 = vadd.xlane.f32.xlu0 %v1231
        %v1250 = vpop.xlane.xlu0 %1249
        %1251 = vadd.xlane.f32.xlu0 %v1232
        %v1252 = vpop.xlane.xlu0 %1251
        %1253 = vadd.xlane.f32.xlu0 %v1233
        %v1254 = vpop.xlane.xlu0 %1253
        %1255 = vadd.xlane.f32.xlu0 %v1234
        %v1256 = vpop.xlane.xlu0 %1255
        %1257 = vadd.xlane.f32.xlu0 %v1235
        %v1258 = vpop.xlane.xlu0 %1257
        %1259 = vadd.xlane.f32.xlu0 %v1236
        %v1260 = vpop.xlane.xlu0 %1259
        %1261 = vadd.xlane.f32.xlu0 %v1237
        %v1262 = vpop.xlane.xlu0 %1261
        %1263 = vadd.xlane.f32.xlu0 %v1238
        %v1264 = vpop.xlane.xlu0 %1263
        %1265 = vadd.xlane.f32.xlu0 %v1239
        %v1266 = vpop.xlane.xlu0 %1265
        %1267 = vadd.xlane.f32.xlu0 %v1240
        %v1268 = vpop.xlane.xlu0 %1267
        %1269 = vadd.xlane.f32.xlu0 %v1241
        %v1270 = vpop.xlane.xlu0 %1269
        %1271 = vadd.xlane.f32.xlu0 %v1242
        %v1272 = vpop.xlane.xlu0 %1271
        %1273 = vadd.xlane.f32.xlu0 %v1243
        %v1274 = vpop.xlane.xlu0 %1273
        %1275 = vadd.xlane.f32.xlu0 %v1244
        %v1276 = vpop.xlane.xlu0 %1275
        %v1277 = vmul.f32 %v1246, 0.015625
        %v1278 = vmul.f32 %v1248, 0.015625
        %v1279 = vmul.f32 %v1250, 0.015625
        %v1280 = vmul.f32 %v1252, 0.015625
        %v1281 = vmul.f32 %v1254, 0.015625
        %v1282 = vmul.f32 %v1256, 0.015625
        %v1283 = vmul.f32 %v1258, 0.015625
        %v1284 = vmul.f32 %v1260, 0.015625
        %v1285 = vmul.f32 %v1262, 0.015625
        %v1286 = vmul.f32 %v1264, 0.015625
        %v1287 = vmul.f32 %v1266, 0.015625
        %v1288 = vmul.f32 %v1268, 0.015625
        %v1289 = vmul.f32 %v1270, 0.015625
        %v1290 = vmul.f32 %v1272, 0.015625
        %v1291 = vmul.f32 %v1274, 0.015625
        %v1292 = vmul.f32 %v1276, 0.015625
        %v1293 = vadd.f32 %v1277, 0.001
        %v1294 = vadd.f32 %v1278, 0.001
        %v1295 = vadd.f32 %v1279, 0.001
        %v1296 = vadd.f32 %v1280, 0.001
        %v1297 = vadd.f32 %v1281, 0.001
        %v1298 = vadd.f32 %v1282, 0.001
        %v1299 = vadd.f32 %v1283, 0.001
        %v1300 = vadd.f32 %v1284, 0.001
        %v1301 = vadd.f32 %v1285, 0.001
        %v1302 = vadd.f32 %v1286, 0.001
        %v1303 = vadd.f32 %v1287, 0.001
        %v1304 = vadd.f32 %v1288, 0.001
        %v1305 = vadd.f32 %v1289, 0.001
        %v1306 = vadd.f32 %v1290, 0.001
        %v1307 = vadd.f32 %v1291, 0.001
        %v1308 = vadd.f32 %v1292, 0.001
        %v1309 = vrsqrt.pop %v1293
        %v1310 = vrsqrt.pop %v1294
        %v1311 = vrsqrt.pop %v1295
        %v1312 = vrsqrt.pop %v1296
        %v1313 = vrsqrt.pop %v1297
        %v1314 = vrsqrt.pop %v1298
        %v1315 = vrsqrt.pop %v1299
        %v1316 = vrsqrt.pop %v1300
        %v1317 = vrsqrt.pop %v1301
        %v1318 = vrsqrt.pop %v1302
        %v1319 = vrsqrt.pop %v1303
        %v1320 = vrsqrt.pop %v1304
        %v1321 = vrsqrt.pop %v1305
        %v1322 = vrsqrt.pop %v1306
        %v1323 = vrsqrt.pop %v1307
        %v1324 = vrsqrt.pop %v1308
        %v1325 = vmul.f32 %v1213, %v1309
        %v1326 = vmul.f32 %v1214, %v1310
        %v1327 = vmul.f32 %v1215, %v1311
        %v1328 = vmul.f32 %v1216, %v1312
        %v1329 = vmul.f32 %v1217, %v1313
        %v1330 = vmul.f32 %v1218, %v1314
        %v1331 = vmul.f32 %v1219, %v1315
        %v1332 = vmul.f32 %v1220, %v1316
        %v1333 = vmul.f32 %v1221, %v1317
        %v1334 = vmul.f32 %v1222, %v1318
        %v1335 = vmul.f32 %v1223, %v1319
        %v1336 = vmul.f32 %v1224, %v1320
        %v1337 = vmul.f32 %v1225, %v1321
        %v1338 = vmul.f32 %v1226, %v1322
        %v1339 = vmul.f32 %v1227, %v1323
        %v1340 = vmul.f32 %v1228, %v1324
        %v1342 = vlaneseq
        %v1343 = vshrl.u32 %v1342, 7
        %v1344 = vsub.s32 0, %v1343
        %v1345 = vrot.slane %v1145, %v1344
        %v1347 = vmul.f32 %v1325, %v1345
        %v1348 = vmul.f32 %v1326, %v1345
        %v1349 = vmul.f32 %v1327, %v1345
        %v1350 = vmul.f32 %v1328, %v1345
        %v1351 = vmul.f32 %v1329, %v1345
        %v1352 = vmul.f32 %v1330, %v1345
        %v1353 = vmul.f32 %v1331, %v1345
        %v1354 = vmul.f32 %v1332, %v1345
        %v1355 = vmul.f32 %v1333, %v1345
        %v1356 = vmul.f32 %v1334, %v1345
        %v1357 = vmul.f32 %v1335, %v1345
        %v1358 = vmul.f32 %v1336, %v1345
        %v1359 = vmul.f32 %v1337, %v1345
        %v1360 = vmul.f32 %v1338, %v1345
        %v1361 = vmul.f32 %v1339, %v1345
        %v1362 = vmul.f32 %v1340, %v1345
        %v1364 = vlaneseq
        %v1365 = vshrl.u32 %v1364, 7
        %v1366 = vsub.s32 0, %v1365
        %v1367 = vrot.slane %v1146, %v1366
        %v1369 = vadd.f32 %v1347, %v1367
        %v1370 = vadd.f32 %v1348, %v1367
        %v1371 = vadd.f32 %v1349, %v1367
        %v1372 = vadd.f32 %v1350, %v1367
        %v1373 = vadd.f32 %v1351, %v1367
        %v1374 = vadd.f32 %v1352, %v1367
        %v1375 = vadd.f32 %v1353, %v1367
        %v1376 = vadd.f32 %v1354, %v1367
        %v1377 = vadd.f32 %v1355, %v1367
        %v1378 = vadd.f32 %v1356, %v1367
        %v1379 = vadd.f32 %v1357, %v1367
        %v1380 = vadd.f32 %v1358, %v1367
        %v1381 = vadd.f32 %v1359, %v1367
        %v1382 = vadd.f32 %v1360, %v1367
        %v1383 = vadd.f32 %v1361, %v1367
        %v1384 = vadd.f32 %v1362, %v1367
        %vm1385 = vcmp.gt.f32.partialorder %v1369, 0.0
        %vm1386 = vcmp.gt.f32.partialorder %v1370, 0.0
        %vm1387 = vcmp.gt.f32.partialorder %v1371, 0.0
        %vm1388 = vcmp.gt.f32.partialorder %v1372, 0.0
        %vm1389 = vcmp.gt.f32.partialorder %v1373, 0.0
        %vm1390 = vcmp.gt.f32.partialorder %v1374, 0.0
        %vm1391 = vcmp.gt.f32.partialorder %v1375, 0.0
        %vm1392 = vcmp.gt.f32.partialorder %v1376, 0.0
        %vm1393 = vcmp.gt.f32.partialorder %v1377, 0.0
        %vm1394 = vcmp.gt.f32.partialorder %v1378, 0.0
        %vm1395 = vcmp.gt.f32.partialorder %v1379, 0.0
        %vm1396 = vcmp.gt.f32.partialorder %v1380, 0.0
        %vm1397 = vcmp.gt.f32.partialorder %v1381, 0.0
        %vm1398 = vcmp.gt.f32.partialorder %v1382, 0.0
        %vm1399 = vcmp.gt.f32.partialorder %v1383, 0.0
        %vm1400 = vcmp.gt.f32.partialorder %v1384, 0.0
        %v1401 = vmul.f32 %v1369, 1.442695
        %v1402 = vpow.pop %v1401
        %v1403 = vmul.f32 %v1370, 1.442695
        %v1404 = vpow.pop %v1403
        %v1405 = vmul.f32 %v1371, 1.442695
        %v1406 = vpow.pop %v1405
        %v1407 = vmul.f32 %v1372, 1.442695
        %v1408 = vpow.pop %v1407
        %v1409 = vmul.f32 %v1373, 1.442695
        %v1410 = vpow.pop %v1409
        %v1411 = vmul.f32 %v1374, 1.442695
        %v1412 = vpow.pop %v1411
        %v1413 = vmul.f32 %v1375, 1.442695
        %v1414 = vpow.pop %v1413
        %v1415 = vmul.f32 %v1376, 1.442695
        %v1416 = vpow.pop %v1415
        %v1417 = vmul.f32 %v1377, 1.442695
        %v1418 = vpow.pop %v1417
        %v1419 = vmul.f32 %v1378, 1.442695
        %v1420 = vpow.pop %v1419
        %v1421 = vmul.f32 %v1379, 1.442695
        %v1422 = vpow.pop %v1421
        %v1423 = vmul.f32 %v1380, 1.442695
        %v1424 = vpow.pop %v1423
        %v1425 = vmul.f32 %v1381, 1.442695
        %v1426 = vpow.pop %v1425
        %v1427 = vmul.f32 %v1382, 1.442695
        %v1428 = vpow.pop %v1427
        %v1429 = vmul.f32 %v1383, 1.442695
        %v1430 = vpow.pop %v1429
        %v1431 = vmul.f32 %v1384, 1.442695
        %v1432 = vpow.pop %v1431
        %v1433 = vsub.f32 %v1402, 1.0
        %v1434 = vsub.f32 %v1404, 1.0
        %v1435 = vsub.f32 %v1406, 1.0
        %v1436 = vsub.f32 %v1408, 1.0
        %v1437 = vsub.f32 %v1410, 1.0
        %v1438 = vsub.f32 %v1412, 1.0
        %v1439 = vsub.f32 %v1414, 1.0
        %v1440 = vsub.f32 %v1416, 1.0
        %v1441 = vsub.f32 %v1418, 1.0
        %v1442 = vsub.f32 %v1420, 1.0
        %v1443 = vsub.f32 %v1422, 1.0
        %v1444 = vsub.f32 %v1424, 1.0
        %v1445 = vsub.f32 %v1426, 1.0
        %v1446 = vsub.f32 %v1428, 1.0
        %v1447 = vsub.f32 %v1430, 1.0
        %v1448 = vsub.f32 %v1432, 1.0
        %v1449 = vsel %vm1385, %v1369, %v1433
        %v1450 = vsel %vm1386, %v1370, %v1434
        %v1451 = vsel %vm1387, %v1371, %v1435
        %v1452 = vsel %vm1388, %v1372, %v1436
        %v1453 = vsel %vm1389, %v1373, %v1437
        %v1454 = vsel %vm1390, %v1374, %v1438
        %v1455 = vsel %vm1391, %v1375, %v1439
        %v1456 = vsel %vm1392, %v1376, %v1440
        %v1457 = vsel %vm1393, %v1377, %v1441
        %v1458 = vsel %vm1394, %v1378, %v1442
        %v1459 = vsel %vm1395, %v1379, %v1443
        %v1460 = vsel %vm1396, %v1380, %v1444
        %v1461 = vsel %vm1397, %v1381, %v1445
        %v1462 = vsel %vm1398, %v1382, %v1446
        %v1463 = vsel %vm1399, %v1383, %v1447
        %v1464 = vsel %vm1400, %v1384, %v1448
        %v1465 = vld [vmem:[%s8] sm:$0xff]
        %v1466 = vld [vmem:[%s8 + $0x8] sm:$0xff]
        %v1467 = vld [vmem:[%s8 + $0x10] sm:$0xff]
        %v1468 = vld [vmem:[%s8 + $0x18] sm:$0xff]
        %v1469 = vld [vmem:[%s8 + $0x20] sm:$0xff]
        %v1470 = vld [vmem:[%s8 + $0x28] sm:$0xff]
        %v1471 = vld [vmem:[%s8 + $0x30] sm:$0xff]
        %v1472 = vld [vmem:[%s8 + $0x38] sm:$0xff]
        %v1473 = vld [vmem:[%s8 + $0x40] sm:$0xff]
        %v1474 = vld [vmem:[%s8 + $0x48] sm:$0xff]
        %v1475 = vld [vmem:[%s8 + $0x50] sm:$0xff]
        %v1476 = vld [vmem:[%s8 + $0x58] sm:$0xff]
        %v1477 = vld [vmem:[%s8 + $0x60] sm:$0xff]
        %v1478 = vld [vmem:[%s8 + $0x68] sm:$0xff]
        %v1479 = vld [vmem:[%s8 + $0x70] sm:$0xff]
        %v1480 = vld [vmem:[%s8 + $0x78] sm:$0xff]
        %1481 = vmatprep.subr.mxu0 0.0
        %1482 = vmatpush1.msra.mxu0 %v1480
        %1483 = vmatprep.subr.mxu0 0.0
        %1484 = vmatpush1.msra.mxu0 %v1479
        %1485 = vmatprep.subr.mxu0 0.0
        %1486 = vmatpush1.msra.mxu0 %v1478
        %1487 = vmatprep.subr.mxu0 0.0
        %1488 = vmatpush1.msra.mxu0 %v1477
        %1489 = vmatprep.subr.mxu0 0.0
        %1490 = vmatpush1.msra.mxu0 %v1476
        %1491 = vmatprep.subr.mxu0 0.0
        %1492 = vmatpush1.msra.mxu0 %v1475
        %1493 = vmatprep.subr.mxu0 0.0
        %1494 = vmatpush1.msra.mxu0 %v1474
        %1495 = vmatprep.subr.mxu0 0.0
        %1496 = vmatpush1.msra.mxu0 %v1473
        %1497 = vmatprep.subr.mxu0 0.0
        %1498 = vmatpush1.msra.mxu0 %v1472
        %1499 = vmatprep.subr.mxu0 0.0
        %1500 = vmatpush1.msra.mxu0 %v1471
        %1501 = vmatprep.subr.mxu0 0.0
        %1502 = vmatpush1.msra.mxu0 %v1470
        %1503 = vmatprep.subr.mxu0 0.0
        %1504 = vmatpush1.msra.mxu0 %v1469
        %1505 = vmatprep.subr.mxu0 0.0
        %1506 = vmatpush1.msra.mxu0 %v1468
        %1507 = vmatprep.subr.mxu0 0.0
        %1508 = vmatpush1.msra.mxu0 %v1467
        %1509 = vmatprep.subr.mxu0 0.0
        %1510 = vmatpush1.msra.mxu0 %v1466
        %1511 = vmatprep.subr.mxu0 0.0
        %1512 = vmatpush1.msra.mxu0 %v1465
        %1513 = vmatprep.subr.mxu0 0.0
        %1514 = vmatpush2.msra.mxu0 0.0
        %1515 = vmatprep.subr.mxu0 0.0
        %1516 = vmatpush2.msra.mxu0 0.0
        %1517 = vmatprep.subr.mxu0 0.0
        %1518 = vmatpush2.msra.mxu0 0.0
        %1519 = vmatprep.subr.mxu0 0.0
        %1520 = vmatpush2.msra.mxu0 0.0
        %1521 = vmatprep.subr.mxu0 0.0
        %1522 = vmatpush2.msra.mxu0 0.0
        %1523 = vmatprep.subr.mxu0 0.0
        %1524 = vmatpush2.msra.mxu0 0.0
        %1525 = vmatprep.subr.mxu0 0.0
        %1526 = vmatpush2.msra.mxu0 0.0
        %1527 = vmatprep.subr.mxu0 0.0
        %1528 = vmatpush2.msra.mxu0 0.0
        %1529 = vmatprep.subr.mxu0 0.0
        %1530 = vmatpush2.msra.mxu0 0.0
        %1531 = vmatprep.subr.mxu0 0.0
        %1532 = vmatpush2.msra.mxu0 0.0
        %1533 = vmatprep.subr.mxu0 0.0
        %1534 = vmatpush2.msra.mxu0 0.0
        %1535 = vmatprep.subr.mxu0 0.0
        %1536 = vmatpush2.msra.mxu0 0.0
        %1537 = vmatprep.subr.mxu0 0.0
        %1538 = vmatpush2.msra.mxu0 0.0
        %1539 = vmatprep.subr.mxu0 0.0
        %1540 = vmatpush2.msra.mxu0 0.0
        %1541 = vmatprep.subr.mxu0 0.0
        %1542 = vmatpush2.msra.mxu0 0.0
        %1543 = vmatprep.subr.mxu0 0.0
        %1544 = vmatpush2.msra.mxu0 0.0
        %1545 = vmatprep.mubr.f32.mxu0 0.0
        %1546 = vmatmul.mubr.f32.gmra.mxu0 %v1449
        %v1547 = vpop.f32.mrf.mxu0
        %v1548 = vadd.f32 0.0, %v1547
        %v1549 = vpop.f32.mrf.mxu0
        %1550 = vmatprep.mubr.f32.mxu0 0.0
        %1551 = vmatmul.mubr.f32.gmra.mxu0 %v1450
        %v1552 = vpop.f32.mrf.mxu0
        %v1553 = vadd.f32 0.0, %v1552
        %v1554 = vpop.f32.mrf.mxu0
        %1555 = vmatprep.mubr.f32.mxu0 0.0
        %1556 = vmatmul.mubr.f32.gmra.mxu0 %v1451
        %v1557 = vpop.f32.mrf.mxu0
        %v1558 = vadd.f32 0.0, %v1557
        %v1559 = vpop.f32.mrf.mxu0
        %1560 = vmatprep.mubr.f32.mxu0 0.0
        %1561 = vmatmul.mubr.f32.gmra.mxu0 %v1452
        %v1562 = vpop.f32.mrf.mxu0
        %v1563 = vadd.f32 0.0, %v1562
        %v1564 = vpop.f32.mrf.mxu0
        %1565 = vmatprep.mubr.f32.mxu0 0.0
        %1566 = vmatmul.mubr.f32.gmra.mxu0 %v1453
        %v1567 = vpop.f32.mrf.mxu0
        %v1568 = vadd.f32 0.0, %v1567
        %v1569 = vpop.f32.mrf.mxu0
        %1570 = vmatprep.mubr.f32.mxu0 0.0
        %1571 = vmatmul.mubr.f32.gmra.mxu0 %v1454
        %v1572 = vpop.f32.mrf.mxu0
        %v1573 = vadd.f32 0.0, %v1572
        %v1574 = vpop.f32.mrf.mxu0
        %1575 = vmatprep.mubr.f32.mxu0 0.0
        %1576 = vmatmul.mubr.f32.gmra.mxu0 %v1455
        %v1577 = vpop.f32.mrf.mxu0
        %v1578 = vadd.f32 0.0, %v1577
        %v1579 = vpop.f32.mrf.mxu0
        %1580 = vmatprep.mubr.f32.mxu0 0.0
        %1581 = vmatmul.mubr.f32.gmra.mxu0 %v1456
        %v1582 = vpop.f32.mrf.mxu0
        %v1583 = vadd.f32 0.0, %v1582
        %v1584 = vpop.f32.mrf.mxu0
        %1585 = vmatprep.mubr.f32.mxu0 0.0
        %1586 = vmatmul.mubr.f32.gmra.mxu0 %v1457
        %v1587 = vpop.f32.mrf.mxu0
        %v1588 = vadd.f32 0.0, %v1587
        %v1589 = vpop.f32.mrf.mxu0
        %1590 = vmatprep.mubr.f32.mxu0 0.0
        %1591 = vmatmul.mubr.f32.gmra.mxu0 %v1458
        %v1592 = vpop.f32.mrf.mxu0
        %v1593 = vadd.f32 0.0, %v1592
        %v1594 = vpop.f32.mrf.mxu0
        %1595 = vmatprep.mubr.f32.mxu0 0.0
        %1596 = vmatmul.mubr.f32.gmra.mxu0 %v1459
        %v1597 = vpop.f32.mrf.mxu0
        %v1598 = vadd.f32 0.0, %v1597
        %v1599 = vpop.f32.mrf.mxu0
        %1600 = vmatprep.mubr.f32.mxu0 0.0
        %1601 = vmatmul.mubr.f32.gmra.mxu0 %v1460
        %v1602 = vpop.f32.mrf.mxu0
        %v1603 = vadd.f32 0.0, %v1602
        %v1604 = vpop.f32.mrf.mxu0
        %1605 = vmatprep.mubr.f32.mxu0 0.0
        %1606 = vmatmul.mubr.f32.gmra.mxu0 %v1461
        %v1607 = vpop.f32.mrf.mxu0
        %v1608 = vadd.f32 0.0, %v1607
        %v1609 = vpop.f32.mrf.mxu0
        %1610 = vmatprep.mubr.f32.mxu0 0.0
        %1611 = vmatmul.mubr.f32.gmra.mxu0 %v1462
        %v1612 = vpop.f32.mrf.mxu0
        %v1613 = vadd.f32 0.0, %v1612
        %v1614 = vpop.f32.mrf.mxu0
        %1615 = vmatprep.mubr.f32.mxu0 0.0
        %1616 = vmatmul.mubr.f32.gmra.mxu0 %v1463
        %v1617 = vpop.f32.mrf.mxu0
        %v1618 = vadd.f32 0.0, %v1617
        %v1619 = vpop.f32.mrf.mxu0
        %1620 = vmatprep.mubr.f32.mxu0 0.0
        %1621 = vmatmul.mubr.f32.gmra.mxu0 %v1464
        %v1622 = vpop.f32.mrf.mxu0
        %v1623 = vadd.f32 0.0, %v1622
        %v1624 = vpop.f32.mrf.mxu0
        %1625 = vdwg.mxu0
        %v1626 = vld [vmem:[%s9] sm:$0x1]
        %v1627 = vld [vmem:[%s10] sm:$0x1]
        %1628 = vadd.xlane.f32.xlu0 %v1548
        %v1629 = vpop.xlane.xlu0 %1628
        %1630 = vadd.xlane.f32.xlu0 %v1553
        %v1631 = vpop.xlane.xlu0 %1630
        %1632 = vadd.xlane.f32.xlu0 %v1558
        %v1633 = vpop.xlane.xlu0 %1632
        %1634 = vadd.xlane.f32.xlu0 %v1563
        %v1635 = vpop.xlane.xlu0 %1634
        %1636 = vadd.xlane.f32.xlu0 %v1568
        %v1637 = vpop.xlane.xlu0 %1636
        %1638 = vadd.xlane.f32.xlu0 %v1573
        %v1639 = vpop.xlane.xlu0 %1638
        %1640 = vadd.xlane.f32.xlu0 %v1578
        %v1641 = vpop.xlane.xlu0 %1640
        %1642 = vadd.xlane.f32.xlu0 %v1583
        %v1643 = vpop.xlane.xlu0 %1642
        %1644 = vadd.xlane.f32.xlu0 %v1588
        %v1645 = vpop.xlane.xlu0 %1644
        %1646 = vadd.xlane.f32.xlu0 %v1593
        %v1647 = vpop.xlane.xlu0 %1646
        %1648 = vadd.xlane.f32.xlu0 %v1598
        %v1649 = vpop.xlane.xlu0 %1648
        %1650 = vadd.xlane.f32.xlu0 %v1603
        %v1651 = vpop.xlane.xlu0 %1650
        %1652 = vadd.xlane.f32.xlu0 %v1608
        %v1653 = vpop.xlane.xlu0 %1652
        %1654 = vadd.xlane.f32.xlu0 %v1613
        %v1655 = vpop.xlane.xlu0 %1654
        %1656 = vadd.xlane.f32.xlu0 %v1618
        %v1657 = vpop.xlane.xlu0 %1656
        %1658 = vadd.xlane.f32.xlu0 %v1623
        %v1659 = vpop.xlane.xlu0 %1658
        %v1660 = vmul.f32 %v1629, 0.015625
        %v1661 = vmul.f32 %v1631, 0.015625
        %v1662 = vmul.f32 %v1633, 0.015625
        %v1663 = vmul.f32 %v1635, 0.015625
        %v1664 = vmul.f32 %v1637, 0.015625
        %v1665 = vmul.f32 %v1639, 0.015625
        %v1666 = vmul.f32 %v1641, 0.015625
        %v1667 = vmul.f32 %v1643, 0.015625
        %v1668 = vmul.f32 %v1645, 0.015625
        %v1669 = vmul.f32 %v1647, 0.015625
        %v1670 = vmul.f32 %v1649, 0.015625
        %v1671 = vmul.f32 %v1651, 0.015625
        %v1672 = vmul.f32 %v1653, 0.015625
        %v1673 = vmul.f32 %v1655, 0.015625
        %v1674 = vmul.f32 %v1657, 0.015625
        %v1675 = vmul.f32 %v1659, 0.015625
        %v1676 = vsub.f32 %v1548, %v1660
        %v1677 = vsub.f32 %v1553, %v1661
        %v1678 = vsub.f32 %v1558, %v1662
        %v1679 = vsub.f32 %v1563, %v1663
        %v1680 = vsub.f32 %v1568, %v1664
        %v1681 = vsub.f32 %v1573, %v1665
        %v1682 = vsub.f32 %v1578, %v1666
        %v1683 = vsub.f32 %v1583, %v1667
        %v1684 = vsub.f32 %v1588, %v1668
        %v1685 = vsub.f32 %v1593, %v1669
        %v1686 = vsub.f32 %v1598, %v1670
        %v1687 = vsub.f32 %v1603, %v1671
        %v1688 = vsub.f32 %v1608, %v1672
        %v1689 = vsub.f32 %v1613, %v1673
        %v1690 = vsub.f32 %v1618, %v1674
        %v1691 = vsub.f32 %v1623, %v1675
        %v1692 = vsel %vm1212, %v1676, 0.0
        %v1693 = vsel %vm1212, %v1677, 0.0
        %v1694 = vsel %vm1212, %v1678, 0.0
        %v1695 = vsel %vm1212, %v1679, 0.0
        %v1696 = vsel %vm1212, %v1680, 0.0
        %v1697 = vsel %vm1212, %v1681, 0.0
        %v1698 = vsel %vm1212, %v1682, 0.0
        %v1699 = vsel %vm1212, %v1683, 0.0
        %v1700 = vsel %vm1212, %v1684, 0.0
        %v1701 = vsel %vm1212, %v1685, 0.0
        %v1702 = vsel %vm1212, %v1686, 0.0
        %v1703 = vsel %vm1212, %v1687, 0.0
        %v1704 = vsel %vm1212, %v1688, 0.0
        %v1705 = vsel %vm1212, %v1689, 0.0
        %v1706 = vsel %vm1212, %v1690, 0.0
        %v1707 = vsel %vm1212, %v1691, 0.0
        %v1708 = vmul.f32 %v1692, %v1692
        %v1709 = vmul.f32 %v1693, %v1693
        %v1710 = vmul.f32 %v1694, %v1694
        %v1711 = vmul.f32 %v1695, %v1695
        %v1712 = vmul.f32 %v1696, %v1696
        %v1713 = vmul.f32 %v1697, %v1697
        %v1714 = vmul.f32 %v1698, %v1698
        %v1715 = vmul.f32 %v1699, %v1699
        %v1716 = vmul.f32 %v1700, %v1700
        %v1717 = vmul.f32 %v1701, %v1701
        %v1718 = vmul.f32 %v1702, %v1702
        %v1719 = vmul.f32 %v1703, %v1703
        %v1720 = vmul.f32 %v1704, %v1704
        %v1721 = vmul.f32 %v1705, %v1705
        %v1722 = vmul.f32 %v1706, %v1706
        %v1723 = vmul.f32 %v1707, %v1707
        %1724 = vadd.xlane.f32.xlu0 %v1708
        %v1725 = vpop.xlane.xlu0 %1724
        %1726 = vadd.xlane.f32.xlu0 %v1709
        %v1727 = vpop.xlane.xlu0 %1726
        %1728 = vadd.xlane.f32.xlu0 %v1710
        %v1729 = vpop.xlane.xlu0 %1728
        %1730 = vadd.xlane.f32.xlu0 %v1711
        %v1731 = vpop.xlane.xlu0 %1730
        %1732 = vadd.xlane.f32.xlu0 %v1712
        %v1733 = vpop.xlane.xlu0 %1732
        %1734 = vadd.xlane.f32.xlu0 %v1713
        %v1735 = vpop.xlane.xlu0 %1734
        %1736 = vadd.xlane.f32.xlu0 %v1714
        %v1737 = vpop.xlane.xlu0 %1736
        %1738 = vadd.xlane.f32.xlu0 %v1715
        %v1739 = vpop.xlane.xlu0 %1738
        %1740 = vadd.xlane.f32.xlu0 %v1716
        %v1741 = vpop.xlane.xlu0 %1740
        %1742 = vadd.xlane.f32.xlu0 %v1717
        %v1743 = vpop.xlane.xlu0 %1742
        %1744 = vadd.xlane.f32.xlu0 %v1718
        %v1745 = vpop.xlane.xlu0 %1744
        %1746 = vadd.xlane.f32.xlu0 %v1719
        %v1747 = vpop.xlane.xlu0 %1746
        %1748 = vadd.xlane.f32.xlu0 %v1720
        %v1749 = vpop.xlane.xlu0 %1748
        %1750 = vadd.xlane.f32.xlu0 %v1721
        %v1751 = vpop.xlane.xlu0 %1750
        %1752 = vadd.xlane.f32.xlu0 %v1722
        %v1753 = vpop.xlane.xlu0 %1752
        %1754 = vadd.xlane.f32.xlu0 %v1723
        %v1755 = vpop.xlane.xlu0 %1754
        %v1756 = vmul.f32 %v1725, 0.015625
        %v1757 = vmul.f32 %v1727, 0.015625
        %v1758 = vmul.f32 %v1729, 0.015625
        %v1759 = vmul.f32 %v1731, 0.015625
        %v1760 = vmul.f32 %v1733, 0.015625
        %v1761 = vmul.f32 %v1735, 0.015625
        %v1762 = vmul.f32 %v1737, 0.015625
        %v1763 = vmul.f32 %v1739, 0.015625
        %v1764 = vmul.f32 %v1741, 0.015625
        %v1765 = vmul.f32 %v1743, 0.015625
        %v1766 = vmul.f32 %v1745, 0.015625
        %v1767 = vmul.f32 %v1747, 0.015625
        %v1768 = vmul.f32 %v1749, 0.015625
        %v1769 = vmul.f32 %v1751, 0.015625
        %v1770 = vmul.f32 %v1753, 0.015625
        %v1771 = vmul.f32 %v1755, 0.015625
        %v1772 = vadd.f32 %v1756, 0.001
        %v1773 = vadd.f32 %v1757, 0.001
        %v1774 = vadd.f32 %v1758, 0.001
        %v1775 = vadd.f32 %v1759, 0.001
        %v1776 = vadd.f32 %v1760, 0.001
        %v1777 = vadd.f32 %v1761, 0.001
        %v1778 = vadd.f32 %v1762, 0.001
        %v1779 = vadd.f32 %v1763, 0.001
        %v1780 = vadd.f32 %v1764, 0.001
        %v1781 = vadd.f32 %v1765, 0.001
        %v1782 = vadd.f32 %v1766, 0.001
        %v1783 = vadd.f32 %v1767, 0.001
        %v1784 = vadd.f32 %v1768, 0.001
        %v1785 = vadd.f32 %v1769, 0.001
        %v1786 = vadd.f32 %v1770, 0.001
        %v1787 = vadd.f32 %v1771, 0.001
        %v1788 = vrsqrt.pop %v1772
        %v1789 = vrsqrt.pop %v1773
        %v1790 = vrsqrt.pop %v1774
        %v1791 = vrsqrt.pop %v1775
        %v1792 = vrsqrt.pop %v1776
        %v1793 = vrsqrt.pop %v1777
        %v1794 = vrsqrt.pop %v1778
        %v1795 = vrsqrt.pop %v1779
        %v1796 = vrsqrt.pop %v1780
        %v1797 = vrsqrt.pop %v1781
        %v1798 = vrsqrt.pop %v1782
        %v1799 = vrsqrt.pop %v1783
        %v1800 = vrsqrt.pop %v1784
        %v1801 = vrsqrt.pop %v1785
        %v1802 = vrsqrt.pop %v1786
        %v1803 = vrsqrt.pop %v1787
        %v1804 = vmul.f32 %v1692, %v1788
        %v1805 = vmul.f32 %v1693, %v1789
        %v1806 = vmul.f32 %v1694, %v1790
        %v1807 = vmul.f32 %v1695, %v1791
        %v1808 = vmul.f32 %v1696, %v1792
        %v1809 = vmul.f32 %v1697, %v1793
        %v1810 = vmul.f32 %v1698, %v1794
        %v1811 = vmul.f32 %v1699, %v1795
        %v1812 = vmul.f32 %v1700, %v1796
        %v1813 = vmul.f32 %v1701, %v1797
        %v1814 = vmul.f32 %v1702, %v1798
        %v1815 = vmul.f32 %v1703, %v1799
        %v1816 = vmul.f32 %v1704, %v1800
        %v1817 = vmul.f32 %v1705, %v1801
        %v1818 = vmul.f32 %v1706, %v1802
        %v1819 = vmul.f32 %v1707, %v1803
        %v1821 = vlaneseq
        %v1822 = vshrl.u32 %v1821, 7
        %v1823 = vsub.s32 0, %v1822
        %v1824 = vrot.slane %v1626, %v1823
        %v1826 = vmul.f32 %v1804, %v1824
        %v1827 = vmul.f32 %v1805, %v1824
        %v1828 = vmul.f32 %v1806, %v1824
        %v1829 = vmul.f32 %v1807, %v1824
        %v1830 = vmul.f32 %v1808, %v1824
        %v1831 = vmul.f32 %v1809, %v1824
        %v1832 = vmul.f32 %v1810, %v1824
        %v1833 = vmul.f32 %v1811, %v1824
        %v1834 = vmul.f32 %v1812, %v1824
        %v1835 = vmul.f32 %v1813, %v1824
        %v1836 = vmul.f32 %v1814, %v1824
        %v1837 = vmul.f32 %v1815, %v1824
        %v1838 = vmul.f32 %v1816, %v1824
        %v1839 = vmul.f32 %v1817, %v1824
        %v1840 = vmul.f32 %v1818, %v1824
        %v1841 = vmul.f32 %v1819, %v1824
        %v1843 = vlaneseq
        %v1844 = vshrl.u32 %v1843, 7
        %v1845 = vsub.s32 0, %v1844
        %v1846 = vrot.slane %v1627, %v1845
        %v1848 = vadd.f32 %v1826, %v1846
        %v1849 = vadd.f32 %v1827, %v1846
        %v1850 = vadd.f32 %v1828, %v1846
        %v1851 = vadd.f32 %v1829, %v1846
        %v1852 = vadd.f32 %v1830, %v1846
        %v1853 = vadd.f32 %v1831, %v1846
        %v1854 = vadd.f32 %v1832, %v1846
        %v1855 = vadd.f32 %v1833, %v1846
        %v1856 = vadd.f32 %v1834, %v1846
        %v1857 = vadd.f32 %v1835, %v1846
        %v1858 = vadd.f32 %v1836, %v1846
        %v1859 = vadd.f32 %v1837, %v1846
        %v1860 = vadd.f32 %v1838, %v1846
        %v1861 = vadd.f32 %v1839, %v1846
        %v1862 = vadd.f32 %v1840, %v1846
        %v1863 = vadd.f32 %v1841, %v1846
        %vm1864 = vcmp.gt.f32.partialorder %v1848, 0.0
        %vm1865 = vcmp.gt.f32.partialorder %v1849, 0.0
        %vm1866 = vcmp.gt.f32.partialorder %v1850, 0.0
        %vm1867 = vcmp.gt.f32.partialorder %v1851, 0.0
        %vm1868 = vcmp.gt.f32.partialorder %v1852, 0.0
        %vm1869 = vcmp.gt.f32.partialorder %v1853, 0.0
        %vm1870 = vcmp.gt.f32.partialorder %v1854, 0.0
        %vm1871 = vcmp.gt.f32.partialorder %v1855, 0.0
        %vm1872 = vcmp.gt.f32.partialorder %v1856, 0.0
        %vm1873 = vcmp.gt.f32.partialorder %v1857, 0.0
        %vm1874 = vcmp.gt.f32.partialorder %v1858, 0.0
        %vm1875 = vcmp.gt.f32.partialorder %v1859, 0.0
        %vm1876 = vcmp.gt.f32.partialorder %v1860, 0.0
        %vm1877 = vcmp.gt.f32.partialorder %v1861, 0.0
        %vm1878 = vcmp.gt.f32.partialorder %v1862, 0.0
        %vm1879 = vcmp.gt.f32.partialorder %v1863, 0.0
        %v1880 = vmul.f32 %v1848, 1.442695
        %v1881 = vpow.pop %v1880
        %v1882 = vmul.f32 %v1849, 1.442695
        %v1883 = vpow.pop %v1882
        %v1884 = vmul.f32 %v1850, 1.442695
        %v1885 = vpow.pop %v1884
        %v1886 = vmul.f32 %v1851, 1.442695
        %v1887 = vpow.pop %v1886
        %v1888 = vmul.f32 %v1852, 1.442695
        %v1889 = vpow.pop %v1888
        %v1890 = vmul.f32 %v1853, 1.442695
        %v1891 = vpow.pop %v1890
        %v1892 = vmul.f32 %v1854, 1.442695
        %v1893 = vpow.pop %v1892
        %v1894 = vmul.f32 %v1855, 1.442695
        %v1895 = vpow.pop %v1894
        %v1896 = vmul.f32 %v1856, 1.442695
        %v1897 = vpow.pop %v1896
        %v1898 = vmul.f32 %v1857, 1.442695
        %v1899 = vpow.pop %v1898
        %v1900 = vmul.f32 %v1858, 1.442695
        %v1901 = vpow.pop %v1900
        %v1902 = vmul.f32 %v1859, 1.442695
        %v1903 = vpow.pop %v1902
        %v1904 = vmul.f32 %v1860, 1.442695
        %v1905 = vpow.pop %v1904
        %v1906 = vmul.f32 %v1861, 1.442695
        %v1907 = vpow.pop %v1906
        %v1908 = vmul.f32 %v1862, 1.442695
        %v1909 = vpow.pop %v1908
        %v1910 = vmul.f32 %v1863, 1.442695
        %v1911 = vpow.pop %v1910
        %v1912 = vsub.f32 %v1881, 1.0
        %v1913 = vsub.f32 %v1883, 1.0
        %v1914 = vsub.f32 %v1885, 1.0
        %v1915 = vsub.f32 %v1887, 1.0
        %v1916 = vsub.f32 %v1889, 1.0
        %v1917 = vsub.f32 %v1891, 1.0
        %v1918 = vsub.f32 %v1893, 1.0
        %v1919 = vsub.f32 %v1895, 1.0
        %v1920 = vsub.f32 %v1897, 1.0
        %v1921 = vsub.f32 %v1899, 1.0
        %v1922 = vsub.f32 %v1901, 1.0
        %v1923 = vsub.f32 %v1903, 1.0
        %v1924 = vsub.f32 %v1905, 1.0
        %v1925 = vsub.f32 %v1907, 1.0
        %v1926 = vsub.f32 %v1909, 1.0
        %v1927 = vsub.f32 %v1911, 1.0
        %v1928 = vsel %vm1864, %v1848, %v1912
        %v1929 = vsel %vm1865, %v1849, %v1913
        %v1930 = vsel %vm1866, %v1850, %v1914
        %v1931 = vsel %vm1867, %v1851, %v1915
        %v1932 = vsel %vm1868, %v1852, %v1916
        %v1933 = vsel %vm1869, %v1853, %v1917
        %v1934 = vsel %vm1870, %v1854, %v1918
        %v1935 = vsel %vm1871, %v1855, %v1919
        %v1936 = vsel %vm1872, %v1856, %v1920
        %v1937 = vsel %vm1873, %v1857, %v1921
        %v1938 = vsel %vm1874, %v1858, %v1922
        %v1939 = vsel %vm1875, %v1859, %v1923
        %v1940 = vsel %vm1876, %v1860, %v1924
        %v1941 = vsel %vm1877, %v1861, %v1925
        %v1942 = vsel %vm1878, %v1862, %v1926
        %v1943 = vsel %vm1879, %v1863, %v1927
        %v1944 = vld [vmem:[%s11] sm:$0xff]
        %v1945 = vld [vmem:[%s11 + $0x8] sm:$0xff]
        %v1946 = vld [vmem:[%s11 + $0x10] sm:$0xff]
        %v1947 = vld [vmem:[%s11 + $0x18] sm:$0xff]
        %v1948 = vld [vmem:[%s11 + $0x20] sm:$0xff]
        %v1949 = vld [vmem:[%s11 + $0x28] sm:$0xff]
        %v1950 = vld [vmem:[%s11 + $0x30] sm:$0xff]
        %v1951 = vld [vmem:[%s11 + $0x38] sm:$0xff]
        %v1952 = vld [vmem:[%s11 + $0x40] sm:$0xff]
        %v1953 = vld [vmem:[%s11 + $0x48] sm:$0xff]
        %v1954 = vld [vmem:[%s11 + $0x50] sm:$0xff]
        %v1955 = vld [vmem:[%s11 + $0x58] sm:$0xff]
        %v1956 = vld [vmem:[%s11 + $0x60] sm:$0xff]
        %v1957 = vld [vmem:[%s11 + $0x68] sm:$0xff]
        %v1958 = vld [vmem:[%s11 + $0x70] sm:$0xff]
        %v1959 = vld [vmem:[%s11 + $0x78] sm:$0xff]
        %v1960 = vld [vmem:[%s12] sm:$0x1]
        %v1962 = vlaneseq
        %v1963 = vshrl.u32 %v1962, 7
        %v1964 = vsub.s32 0, %v1963
        %v1965 = vrot.slane %v1960, %v1964
        %1967 = vmatprep.subr.mxu0 0.0
        %1968 = vmatpush1.msra.mxu0 %v1959
        %1969 = vmatprep.subr.mxu0 0.0
        %1970 = vmatpush1.msra.mxu0 %v1958
        %1971 = vmatprep.subr.mxu0 0.0
        %1972 = vmatpush1.msra.mxu0 %v1957
        %1973 = vmatprep.subr.mxu0 0.0
        %1974 = vmatpush1.msra.mxu0 %v1956
        %1975 = vmatprep.subr.mxu0 0.0
        %1976 = vmatpush1.msra.mxu0 %v1955
        %1977 = vmatprep.subr.mxu0 0.0
        %1978 = vmatpush1.msra.mxu0 %v1954
        %1979 = vmatprep.subr.mxu0 0.0
        %1980 = vmatpush1.msra.mxu0 %v1953
        %1981 = vmatprep.subr.mxu0 0.0
        %1982 = vmatpush1.msra.mxu0 %v1952
        %1983 = vmatprep.subr.mxu0 0.0
        %1984 = vmatpush1.msra.mxu0 %v1951
        %1985 = vmatprep.subr.mxu0 0.0
        %1986 = vmatpush1.msra.mxu0 %v1950
        %1987 = vmatprep.subr.mxu0 0.0
        %1988 = vmatpush1.msra.mxu0 %v1949
        %1989 = vmatprep.subr.mxu0 0.0
        %1990 = vmatpush1.msra.mxu0 %v1948
        %1991 = vmatprep.subr.mxu0 0.0
        %1992 = vmatpush1.msra.mxu0 %v1947
        %1993 = vmatprep.subr.mxu0 0.0
        %1994 = vmatpush1.msra.mxu0 %v1946
        %1995 = vmatprep.subr.mxu0 0.0
        %1996 = vmatpush1.msra.mxu0 %v1945
        %1997 = vmatprep.subr.mxu0 0.0
        %1998 = vmatpush1.msra.mxu0 %v1944
        %1999 = vmatprep.subr.mxu0 0.0
        %2000 = vmatpush2.msra.mxu0 0.0
        %2001 = vmatprep.subr.mxu0 0.0
        %2002 = vmatpush2.msra.mxu0 0.0
        %2003 = vmatprep.subr.mxu0 0.0
        %2004 = vmatpush2.msra.mxu0 0.0
        %2005 = vmatprep.subr.mxu0 0.0
        %2006 = vmatpush2.msra.mxu0 0.0
        %2007 = vmatprep.subr.mxu0 0.0
        %2008 = vmatpush2.msra.mxu0 0.0
        %2009 = vmatprep.subr.mxu0 0.0
        %2010 = vmatpush2.msra.mxu0 0.0
        %2011 = vmatprep.subr.mxu0 0.0
        %2012 = vmatpush2.msra.mxu0 0.0
        %2013 = vmatprep.subr.mxu0 0.0
        %2014 = vmatpush2.msra.mxu0 0.0
        %2015 = vmatprep.subr.mxu0 0.0
        %2016 = vmatpush2.msra.mxu0 0.0
        %2017 = vmatprep.subr.mxu0 0.0
        %2018 = vmatpush2.msra.mxu0 0.0
        %2019 = vmatprep.subr.mxu0 0.0
        %2020 = vmatpush2.msra.mxu0 0.0
        %2021 = vmatprep.subr.mxu0 0.0
        %2022 = vmatpush2.msra.mxu0 0.0
        %2023 = vmatprep.subr.mxu0 0.0
        %2024 = vmatpush2.msra.mxu0 0.0
        %2025 = vmatprep.subr.mxu0 0.0
        %2026 = vmatpush2.msra.mxu0 0.0
        %2027 = vmatprep.subr.mxu0 0.0
        %2028 = vmatpush2.msra.mxu0 0.0
        %2029 = vmatprep.subr.mxu0 0.0
        %2030 = vmatpush2.msra.mxu0 0.0
        %2031 = vmatprep.mubr.f32.mxu0 0.0
        %2032 = vmatmul.mubr.f32.gmra.mxu0 %v1928
        %v2033 = vpop.f32.mrf.mxu0
        %v2034 = vadd.f32 %v1965, %v2033
        %v2035 = vpop.f32.mrf.mxu0
        %2036 = vmatprep.mubr.f32.mxu0 0.0
        %2037 = vmatmul.mubr.f32.gmra.mxu0 %v1929
        %v2038 = vpop.f32.mrf.mxu0
        %v2039 = vadd.f32 %v1965, %v2038
        %v2040 = vpop.f32.mrf.mxu0
        %2041 = vmatprep.mubr.f32.mxu0 0.0
        %2042 = vmatmul.mubr.f32.gmra.mxu0 %v1930
        %v2043 = vpop.f32.mrf.mxu0
        %v2044 = vadd.f32 %v1965, %v2043
        %v2045 = vpop.f32.mrf.mxu0
        %2046 = vmatprep.mubr.f32.mxu0 0.0
        %2047 = vmatmul.mubr.f32.gmra.mxu0 %v1931
        %v2048 = vpop.f32.mrf.mxu0
        %v2049 = vadd.f32 %v1965, %v2048
        %v2050 = vpop.f32.mrf.mxu0
        %2051 = vmatprep.mubr.f32.mxu0 0.0
        %2052 = vmatmul.mubr.f32.gmra.mxu0 %v1932
        %v2053 = vpop.f32.mrf.mxu0
        %v2054 = vadd.f32 %v1965, %v2053
        %v2055 = vpop.f32.mrf.mxu0
        %2056 = vmatprep.mubr.f32.mxu0 0.0
        %2057 = vmatmul.mubr.f32.gmra.mxu0 %v1933
        %v2058 = vpop.f32.mrf.mxu0
        %v2059 = vadd.f32 %v1965, %v2058
        %v2060 = vpop.f32.mrf.mxu0
        %2061 = vmatprep.mubr.f32.mxu0 0.0
        %2062 = vmatmul.mubr.f32.gmra.mxu0 %v1934
        %v2063 = vpop.f32.mrf.mxu0
        %v2064 = vadd.f32 %v1965, %v2063
        %v2065 = vpop.f32.mrf.mxu0
        %2066 = vmatprep.mubr.f32.mxu0 0.0
        %2067 = vmatmul.mubr.f32.gmra.mxu0 %v1935
        %v2068 = vpop.f32.mrf.mxu0
        %v2069 = vadd.f32 %v1965, %v2068
        %v2070 = vpop.f32.mrf.mxu0
        %2071 = vmatprep.mubr.f32.mxu0 0.0
        %2072 = vmatmul.mubr.f32.gmra.mxu0 %v1936
        %v2073 = vpop.f32.mrf.mxu0
        %v2074 = vadd.f32 %v1965, %v2073
        %v2075 = vpop.f32.mrf.mxu0
        %2076 = vmatprep.mubr.f32.mxu0 0.0
        %2077 = vmatmul.mubr.f32.gmra.mxu0 %v1937
        %v2078 = vpop.f32.mrf.mxu0
        %v2079 = vadd.f32 %v1965, %v2078
        %v2080 = vpop.f32.mrf.mxu0
        %2081 = vmatprep.mubr.f32.mxu0 0.0
        %2082 = vmatmul.mubr.f32.gmra.mxu0 %v1938
        %v2083 = vpop.f32.mrf.mxu0
        %v2084 = vadd.f32 %v1965, %v2083
        %v2085 = vpop.f32.mrf.mxu0
        %2086 = vmatprep.mubr.f32.mxu0 0.0
        %2087 = vmatmul.mubr.f32.gmra.mxu0 %v1939
        %v2088 = vpop.f32.mrf.mxu0
        %v2089 = vadd.f32 %v1965, %v2088
        %v2090 = vpop.f32.mrf.mxu0
        %2091 = vmatprep.mubr.f32.mxu0 0.0
        %2092 = vmatmul.mubr.f32.gmra.mxu0 %v1940
        %v2093 = vpop.f32.mrf.mxu0
        %v2094 = vadd.f32 %v1965, %v2093
        %v2095 = vpop.f32.mrf.mxu0
        %2096 = vmatprep.mubr.f32.mxu0 0.0
        %2097 = vmatmul.mubr.f32.gmra.mxu0 %v1941
        %v2098 = vpop.f32.mrf.mxu0
        %v2099 = vadd.f32 %v1965, %v2098
        %v2100 = vpop.f32.mrf.mxu0
        %2101 = vmatprep.mubr.f32.mxu0 0.0
        %2102 = vmatmul.mubr.f32.gmra.mxu0 %v1942
        %v2103 = vpop.f32.mrf.mxu0
        %v2104 = vadd.f32 %v1965, %v2103
        %v2105 = vpop.f32.mrf.mxu0
        %2106 = vmatprep.mubr.f32.mxu0 0.0
        %2107 = vmatmul.mubr.f32.gmra.mxu0 %v1943
        %v2108 = vpop.f32.mrf.mxu0
        %v2109 = vadd.f32 %v1965, %v2108
        %v2110 = vpop.f32.mrf.mxu0
        %2111 = vdwg.mxu0
        %vm2112 = vcmp.lt.s32.totalorder %v487, 6
        %v2113 = vsel %vm2112, 1, 0
        %vm2114 = vcmp.eq.s32.totalorder %v2113, 1
        %v2115 = vsel %vm2114, %v2034, -1e+30
        %v2116 = vsel %vm2114, %v2039, -1e+30
        %v2117 = vsel %vm2114, %v2044, -1e+30
        %v2118 = vsel %vm2114, %v2049, -1e+30
        %v2119 = vsel %vm2114, %v2054, -1e+30
        %v2120 = vsel %vm2114, %v2059, -1e+30
        %v2121 = vsel %vm2114, %v2064, -1e+30
        %v2122 = vsel %vm2114, %v2069, -1e+30
        %v2123 = vsel %vm2114, %v2074, -1e+30
        %v2124 = vsel %vm2114, %v2079, -1e+30
        %v2125 = vsel %vm2114, %v2084, -1e+30
        %v2126 = vsel %vm2114, %v2089, -1e+30
        %v2127 = vsel %vm2114, %v2094, -1e+30
        %v2128 = vsel %vm2114, %v2099, -1e+30
        %v2129 = vsel %vm2114, %v2104, -1e+30
        %v2130 = vsel %vm2114, %v2109, -1e+30
        %2131 = vmax.xlane.f32.xlu0 %v2115
        %v2132 = vpop.xlane.xlu0 %2131
        %2133 = vmax.xlane.f32.xlu0 %v2116
        %v2134 = vpop.xlane.xlu0 %2133
        %2135 = vmax.xlane.f32.xlu0 %v2117
        %v2136 = vpop.xlane.xlu0 %2135
        %2137 = vmax.xlane.f32.xlu0 %v2118
        %v2138 = vpop.xlane.xlu0 %2137
        %2139 = vmax.xlane.f32.xlu0 %v2119
        %v2140 = vpop.xlane.xlu0 %2139
        %2141 = vmax.xlane.f32.xlu0 %v2120
        %v2142 = vpop.xlane.xlu0 %2141
        %2143 = vmax.xlane.f32.xlu0 %v2121
        %v2144 = vpop.xlane.xlu0 %2143
        %2145 = vmax.xlane.f32.xlu0 %v2122
        %v2146 = vpop.xlane.xlu0 %2145
        %2147 = vmax.xlane.f32.xlu0 %v2123
        %v2148 = vpop.xlane.xlu0 %2147
        %2149 = vmax.xlane.f32.xlu0 %v2124
        %v2150 = vpop.xlane.xlu0 %2149
        %2151 = vmax.xlane.f32.xlu0 %v2125
        %v2152 = vpop.xlane.xlu0 %2151
        %2153 = vmax.xlane.f32.xlu0 %v2126
        %v2154 = vpop.xlane.xlu0 %2153
        %2155 = vmax.xlane.f32.xlu0 %v2127
        %v2156 = vpop.xlane.xlu0 %2155
        %2157 = vmax.xlane.f32.xlu0 %v2128
        %v2158 = vpop.xlane.xlu0 %2157
        %2159 = vmax.xlane.f32.xlu0 %v2129
        %v2160 = vpop.xlane.xlu0 %2159
        %2161 = vmax.xlane.f32.xlu0 %v2130
        %v2162 = vpop.xlane.xlu0 %2161
        %v2163 = vsub.f32 %v2115, %v2132
        %v2164 = vsub.f32 %v2116, %v2134
        %v2165 = vsub.f32 %v2117, %v2136
        %v2166 = vsub.f32 %v2118, %v2138
        %v2167 = vsub.f32 %v2119, %v2140
        %v2168 = vsub.f32 %v2120, %v2142
        %v2169 = vsub.f32 %v2121, %v2144
        %v2170 = vsub.f32 %v2122, %v2146
        %v2171 = vsub.f32 %v2123, %v2148
        %v2172 = vsub.f32 %v2124, %v2150
        %v2173 = vsub.f32 %v2125, %v2152
        %v2174 = vsub.f32 %v2126, %v2154
        %v2175 = vsub.f32 %v2127, %v2156
        %v2176 = vsub.f32 %v2128, %v2158
        %v2177 = vsub.f32 %v2129, %v2160
        %v2178 = vsub.f32 %v2130, %v2162
        %v2179 = vmul.f32 %v2163, 1.442695
        %v2180 = vpow.pop %v2179
        %v2181 = vmul.f32 %v2164, 1.442695
        %v2182 = vpow.pop %v2181
        %v2183 = vmul.f32 %v2165, 1.442695
        %v2184 = vpow.pop %v2183
        %v2185 = vmul.f32 %v2166, 1.442695
        %v2186 = vpow.pop %v2185
        %v2187 = vmul.f32 %v2167, 1.442695
        %v2188 = vpow.pop %v2187
        %v2189 = vmul.f32 %v2168, 1.442695
        %v2190 = vpow.pop %v2189
        %v2191 = vmul.f32 %v2169, 1.442695
        %v2192 = vpow.pop %v2191
        %v2193 = vmul.f32 %v2170, 1.442695
        %v2194 = vpow.pop %v2193
        %v2195 = vmul.f32 %v2171, 1.442695
        %v2196 = vpow.pop %v2195
        %v2197 = vmul.f32 %v2172, 1.442695
        %v2198 = vpow.pop %v2197
        %v2199 = vmul.f32 %v2173, 1.442695
        %v2200 = vpow.pop %v2199
        %v2201 = vmul.f32 %v2174, 1.442695
        %v2202 = vpow.pop %v2201
        %v2203 = vmul.f32 %v2175, 1.442695
        %v2204 = vpow.pop %v2203
        %v2205 = vmul.f32 %v2176, 1.442695
        %v2206 = vpow.pop %v2205
        %v2207 = vmul.f32 %v2177, 1.442695
        %v2208 = vpow.pop %v2207
        %v2209 = vmul.f32 %v2178, 1.442695
        %v2210 = vpow.pop %v2209
        %2211 = vadd.xlane.f32.xlu0 %v2180
        %v2212 = vpop.xlane.xlu0 %2211
        %2213 = vadd.xlane.f32.xlu0 %v2182
        %v2214 = vpop.xlane.xlu0 %2213
        %2215 = vadd.xlane.f32.xlu0 %v2184
        %v2216 = vpop.xlane.xlu0 %2215
        %2217 = vadd.xlane.f32.xlu0 %v2186
        %v2218 = vpop.xlane.xlu0 %2217
        %2219 = vadd.xlane.f32.xlu0 %v2188
        %v2220 = vpop.xlane.xlu0 %2219
        %2221 = vadd.xlane.f32.xlu0 %v2190
        %v2222 = vpop.xlane.xlu0 %2221
        %2223 = vadd.xlane.f32.xlu0 %v2192
        %v2224 = vpop.xlane.xlu0 %2223
        %2225 = vadd.xlane.f32.xlu0 %v2194
        %v2226 = vpop.xlane.xlu0 %2225
        %2227 = vadd.xlane.f32.xlu0 %v2196
        %v2228 = vpop.xlane.xlu0 %2227
        %2229 = vadd.xlane.f32.xlu0 %v2198
        %v2230 = vpop.xlane.xlu0 %2229
        %2231 = vadd.xlane.f32.xlu0 %v2200
        %v2232 = vpop.xlane.xlu0 %2231
        %2233 = vadd.xlane.f32.xlu0 %v2202
        %v2234 = vpop.xlane.xlu0 %2233
        %2235 = vadd.xlane.f32.xlu0 %v2204
        %v2236 = vpop.xlane.xlu0 %2235
        %2237 = vadd.xlane.f32.xlu0 %v2206
        %v2238 = vpop.xlane.xlu0 %2237
        %2239 = vadd.xlane.f32.xlu0 %v2208
        %v2240 = vpop.xlane.xlu0 %2239
        %2241 = vadd.xlane.f32.xlu0 %v2210
        %v2242 = vpop.xlane.xlu0 %2241
        %v2243 = vrcp.pop %v2212
        %v2244 = vrcp.pop %v2214
        %v2245 = vrcp.pop %v2216
        %v2246 = vrcp.pop %v2218
        %v2247 = vrcp.pop %v2220
        %v2248 = vrcp.pop %v2222
        %v2249 = vrcp.pop %v2224
        %v2250 = vrcp.pop %v2226
        %v2251 = vrcp.pop %v2228
        %v2252 = vrcp.pop %v2230
        %v2253 = vrcp.pop %v2232
        %v2254 = vrcp.pop %v2234
        %v2255 = vrcp.pop %v2236
        %v2256 = vrcp.pop %v2238
        %v2257 = vrcp.pop %v2240
        %v2258 = vrcp.pop %v2242
        %v2259 = vmul.f32 %v2180, %v2243
        %v2260 = vmul.f32 %v2182, %v2244
        %v2261 = vmul.f32 %v2184, %v2245
        %v2262 = vmul.f32 %v2186, %v2246
        %v2263 = vmul.f32 %v2188, %v2247
        %v2264 = vmul.f32 %v2190, %v2248
        %v2265 = vmul.f32 %v2192, %v2249
        %v2266 = vmul.f32 %v2194, %v2250
        %v2267 = vmul.f32 %v2196, %v2251
        %v2268 = vmul.f32 %v2198, %v2252
        %v2269 = vmul.f32 %v2200, %v2253
        %v2270 = vmul.f32 %v2202, %v2254
        %v2271 = vmul.f32 %v2204, %v2255
        %v2272 = vmul.f32 %v2206, %v2256
        %v2273 = vmul.f32 %v2208, %v2257
        %v2274 = vmul.f32 %v2210, %v2258
        %v2275 = vmul.f32 %v2259, 0.99
        %v2276 = vmul.f32 %v2260, 0.99
        %v2277 = vmul.f32 %v2261, 0.99
        %v2278 = vmul.f32 %v2262, 0.99
        %v2279 = vmul.f32 %v2263, 0.99
        %v2280 = vmul.f32 %v2264, 0.99
        %v2281 = vmul.f32 %v2265, 0.99
        %v2282 = vmul.f32 %v2266, 0.99
        %v2283 = vmul.f32 %v2267, 0.99
        %v2284 = vmul.f32 %v2268, 0.99
        %v2285 = vmul.f32 %v2269, 0.99
        %v2286 = vmul.f32 %v2270, 0.99
        %v2287 = vmul.f32 %v2271, 0.99
        %v2288 = vmul.f32 %v2272, 0.99
        %v2289 = vmul.f32 %v2273, 0.99
        %v2290 = vmul.f32 %v2274, 0.99
        %v2291 = vadd.f32 %v2275, 0.0016666667
        %v2292 = vadd.f32 %v2276, 0.0016666667
        %v2293 = vadd.f32 %v2277, 0.0016666667
        %v2294 = vadd.f32 %v2278, 0.0016666667
        %v2295 = vadd.f32 %v2279, 0.0016666667
        %v2296 = vadd.f32 %v2280, 0.0016666667
        %v2297 = vadd.f32 %v2281, 0.0016666667
        %v2298 = vadd.f32 %v2282, 0.0016666667
        %v2299 = vadd.f32 %v2283, 0.0016666667
        %v2300 = vadd.f32 %v2284, 0.0016666667
        %v2301 = vadd.f32 %v2285, 0.0016666667
        %v2302 = vadd.f32 %v2286, 0.0016666667
        %v2303 = vadd.f32 %v2287, 0.0016666667
        %v2304 = vadd.f32 %v2288, 0.0016666667
        %v2305 = vadd.f32 %v2289, 0.0016666667
        %v2306 = vadd.f32 %v2290, 0.0016666667
        %v2307 = vlog2.pop %v2291
        %v2308 = vmul.f32 %v2307, 0.6931472
        %v2309 = vlog2.pop %v2292
        %v2310 = vmul.f32 %v2309, 0.6931472
        %v2311 = vlog2.pop %v2293
        %v2312 = vmul.f32 %v2311, 0.6931472
        %v2313 = vlog2.pop %v2294
        %v2314 = vmul.f32 %v2313, 0.6931472
        %v2315 = vlog2.pop %v2295
        %v2316 = vmul.f32 %v2315, 0.6931472
        %v2317 = vlog2.pop %v2296
        %v2318 = vmul.f32 %v2317, 0.6931472
        %v2319 = vlog2.pop %v2297
        %v2320 = vmul.f32 %v2319, 0.6931472
        %v2321 = vlog2.pop %v2298
        %v2322 = vmul.f32 %v2321, 0.6931472
        %v2323 = vlog2.pop %v2299
        %v2324 = vmul.f32 %v2323, 0.6931472
        %v2325 = vlog2.pop %v2300
        %v2326 = vmul.f32 %v2325, 0.6931472
        %v2327 = vlog2.pop %v2301
        %v2328 = vmul.f32 %v2327, 0.6931472
        %v2329 = vlog2.pop %v2302
        %v2330 = vmul.f32 %v2329, 0.6931472
        %v2331 = vlog2.pop %v2303
        %v2332 = vmul.f32 %v2331, 0.6931472
        %v2333 = vlog2.pop %v2304
        %v2334 = vmul.f32 %v2333, 0.6931472
        %v2335 = vlog2.pop %v2305
        %v2336 = vmul.f32 %v2335, 0.6931472
        %v2337 = vlog2.pop %v2306
        %v2338 = vmul.f32 %v2337, 0.6931472
        %2339 = vst [vmem:[%s466] sm:$0xff] %v2308
        %2340 = vst [vmem:[%s466 + $0x8] sm:$0xff] %v2310
        %2341 = vst [vmem:[%s466 + $0x10] sm:$0xff] %v2312
        %2342 = vst [vmem:[%s466 + $0x18] sm:$0xff] %v2314
        %2343 = vst [vmem:[%s466 + $0x20] sm:$0xff] %v2316
        %2344 = vst [vmem:[%s466 + $0x28] sm:$0xff] %v2318
        %2345 = vst [vmem:[%s466 + $0x30] sm:$0xff] %v2320
        %2346 = vst [vmem:[%s466 + $0x38] sm:$0xff] %v2322
        %2347 = vst [vmem:[%s466 + $0x40] sm:$0xff] %v2324
        %2348 = vst [vmem:[%s466 + $0x48] sm:$0xff] %v2326
        %2349 = vst [vmem:[%s466 + $0x50] sm:$0xff] %v2328
        %2350 = vst [vmem:[%s466 + $0x58] sm:$0xff] %v2330
        %2351 = vst [vmem:[%s466 + $0x60] sm:$0xff] %v2332
        %2352 = vst [vmem:[%s466 + $0x68] sm:$0xff] %v2334
        %2353 = vst [vmem:[%s466 + $0x70] sm:$0xff] %v2336
        %2354 = vst [vmem:[%s466 + $0x78] sm:$0xff] %v2338
        %s2355 = sand.u32 %s323, 1
        %s2356 = scalar_lea.sflag [#allocation3], %s2355
        %s2357 = sand.u32 %s323, 1
        %s2358 = smul.addr %s2357, 128
        %s2359 = scalar_lea.vmem [#allocation2], %s2358
        // Predicated region
        $region73: #{tpu_custom_call.1} parent=71 // pred_check
          %p2360 = pneg %p333
        $region74: #{tpu_custom_call.1} parent=71 // pred_check_branch
          %2362 = sbr.rel (%p2360) target = $region76
        $region75: #{tpu_custom_call.1} parent=71 // pred_region
          %s2363 = smul.u32 16, %s27
          %s2365 = ssub.s32 2048, 2048
          %2366 = vsyncadd %s2356, %s2365
          %s2367 = smul.addr %s2363, 128
          %s2368 = scalar_lea.hbm %s13, %s2367
          %s2369 = sshll.u32 %s2359, 4
          %s2370 = int_to_ptr.vmem [resolvable:$true] %s2369
          %2375 = dma.vmem_to_hbm [thread:$0]  %s2370, 2048, %s2368, %s2356, 128, 128, 8
        $region76: #{tpu_custom_call.1} parent=71 // pred_fallthru
          _
      $region72: #{tpu_custom_call.1} parent=5 // pred_fallthru
        _
      %p2376 = scmp.le.s32.totalorder 2, %s22
      // Predicated region
      $region77: #{tpu_custom_call.1} parent=5 // pred_check
        %p2377 = pneg %p2376
      $region78: #{tpu_custom_call.1} parent=5 // pred_check_branch
        %2379 = sbr.rel (%p2377) target = $region80
      $region79: #{tpu_custom_call.1} parent=5 // pred_region
        %s2380 = ssub.s32 %s22, 2
        // Predicated region
        $region81: #{tpu_custom_call.1} parent=79 // pred_check
          %p2381 = pneg %p339
        $region82: #{tpu_custom_call.1} parent=79 // pred_check_branch
          %2383 = sbr.rel (%p2381) target = $region84
        $region83: #{tpu_custom_call.1} parent=79 // pred_region
          %s2384 = sand.u32 %s324, 1
          %s2385 = scalar_lea.sflag [#allocation3], %s2384
          %s2386 = sand.u32 %s324, 1
          %s2387 = smul.addr %s2386, 128
          %s2388 = scalar_lea.vmem [#allocation2], %s2387
          %2389 = dma.done %s2385, 2048
        $region84: #{tpu_custom_call.1} parent=79 // pred_fallthru
          _
      $region80: #{tpu_custom_call.1} parent=5 // pred_fallthru
        _
    $region6: #{tpu_custom_call.1} parent=1 // loop_footer
      %s26 = sadd.s32 1, %s22
    $region7: #{tpu_custom_call.1} parent=1 // loop_footer_branch
      %21 = sbr.rel target = $region3
    $region8: #{tpu_custom_call.1} parent=1 // loop_exit
      _
    %2390 = vsyncpa [#allocation3], 1
    %s2391 = scalar_lea.sflag [#allocation3], 1
    %2392 = vsyncpa %s2391, 1

</llo_original>
